<compile_context>
chip_gen: v7x
topology: tpu7x:2x2x1
jax: 0.10.0
libtpu: 0.0.40
codegen_flags: <defaults>
</compile_context>

<pallas_src>
import jax
import jax.numpy as jnp
from jax import lax
from jax.experimental import pallas as pl
from jax.experimental.pallas import tpu as pltpu


def _round_up(x, m):
    return -(-x // m) * m


# ----------------------------- Pallas kernel --------------------------------
def lstm_extractor_kernel(maxlen_ref,                      # SMEM scalar prefetch (1,)
                          len_ref, emb_ref,                # (Bt,1) i32 / (T,Bt,D) bf16
                          wih_ref, bx_ref,                 # (D,8H) bf16 / (1,8H) f32
                          whh_f_ref, whh_b_ref,            # (H,4H) bf16 each
                          w_mlp_ref, b_mlp_ref,            # (2H,M) bf16 / (1,M) f32
                          w_dec_ref, b_dec_ref,            # (M,Cp) bf16 / (1,Cp) f32
                          out_ref,                         # (Bt,Cp) f32
                          gxf_ref, gxb_ref,                # (T*Bt,4H) f32 scratch
                          hf_ref, cf_ref, pf_ref,          # (Bt,H) f32 scratch
                          hb_ref, cb_ref, pb_ref):
    T, Bt, D = emb_ref.shape
    H = whh_f_ref.shape[0]
    G = 4 * H
    neg_inf = jnp.float32(-jnp.inf)

    # ---- 1) Hoisted input projection -----------------------------------------
    # One (T*Bt, D) x (D, 8H) bf16 matmul (+bias) replaces 2*T tiny per-step
    # matmuls on the recurrence chain.  (T, Bt, D) -> (T*Bt, D) is a
    # tile-aligned major-dim collapse (Bt is a multiple of 16 for bf16).
    emb2d = emb_ref[...].reshape(T * Bt, D)
    gx = jnp.dot(emb2d, wih_ref[...],
                 preferred_element_type=jnp.float32) + bx_ref[...]
    gxf_ref[...] = gx[:, :G]          # forward-direction  gates_x (T*Bt, 4H)
    gxb_ref[...] = gx[:, G:]          # backward-direction gates_x (T*Bt, 4H)
    # TODO(synk): chunk this projection over T with a double-buffered scratch
    # for v7x-scale T*Bt (bounds VMEM and overlaps with the recurrence).

    # ---- per-tile state init (scratch persists across grid steps) ------------
    zeros = jnp.zeros((Bt, H), jnp.float32)
    hf_ref[...] = zeros
    cf_ref[...] = zeros
    hb_ref[...] = zeros
    cb_ref[...] = zeros
    pf_ref[...] = jnp.full((Bt, H), neg_inf, jnp.float32)
    pb_ref[...] = jnp.full((Bt, H), neg_inf, jnp.float32)

    lens = len_ref[...]                # (Bt, 1) int32 per-example lengths
    max_len = maxlen_ref[0]            # dynamic recurrence trip count
    whh_f = whh_f_ref[...]             # (H, 4H) bf16
    whh_b = whh_b_ref[...]

    def gate_math(gates, c):
        # Gate columns were permuted host-side to [i, f, o | g]:
        # one fused sigmoid over 3H columns + one tanh per direction.
        s = jax.nn.sigmoid(gates[:, :3 * H])
        g = jnp.tanh(gates[:, 3 * H:])
        i, f, o = s[:, :H], s[:, H:2 * H], s[:, 2 * H:3 * H]
        c_new = f * c + i * g
        h_new = o * jnp.tanh(c_new)
        return h_new, c_new

    # ---- 2) Fused bidirectional recurrence, bounded by max_len ---------------
    def body(step, carry):
        t_f = step
        t_b = max_len - 1 - step       # backward covers t = max_len-1 .. 0

        gx_f = gxf_ref[pl.ds(pl.multiple_of(t_f * Bt, Bt), Bt), :]
        gx_b = gxb_ref[pl.ds(pl.multiple_of(t_b * Bt, Bt), Bt), :]

        h_f = hf_ref[...]
        c_f = cf_ref[...]
        h_b = hb_ref[...]
        c_b = cb_ref[...]

        # Two independent h @ Whh dots (bf16 in, f32 acc) per step.
        rec_f = jnp.dot(h_f.astype(jnp.bfloat16), whh_f,
                        preferred_element_type=jnp.float32)
        rec_b = jnp.dot(h_b.astype(jnp.bfloat16), whh_b,
                        preferred_element_type=jnp.float32)

        hn_f, cn_f = gate_math(gx_f + rec_f, c_f)
        hn_b, cn_b = gate_math(gx_b + rec_b, c_b)

        valid_f = t_f < lens           # (Bt, 1) bool
        valid_b = t_b < lens

        # Packed-sequence semantics: state only advances on valid timesteps
        # (backward direction effectively starts at each row's last token).
        h_f = jnp.where(valid_f, hn_f, h_f)
        c_f = jnp.where(valid_f, cn_f, c_f)
        h_b = jnp.where(valid_b, hn_b, h_b)
        c_b = jnp.where(valid_b, cn_b, c_b)

        hf_ref[...] = h_f
        cf_ref[...] = c_f
        hb_ref[...] = h_b
        cb_ref[...] = c_b
        # Max-pool over valid positions only; zero padding handled post-loop.
        pf_ref[...] = jnp.maximum(pf_ref[...], jnp.where(valid_f, h_f, neg_inf))
        pb_ref[...] = jnp.maximum(pb_ref[...], jnp.where(valid_b, h_b, neg_inf))
        return carry

    lax.fori_loop(0, max_len, body, 0)

    # pad_packed_sequence zero-pads rows shorter than max_len, so their
    # max-pool also sees 0 (this also rescues length-0 padded rows from -inf).
    pool_f = pf_ref[...]
    pool_b = pb_ref[...]
    short = lens < max_len
    pool_f = jnp.where(short, jnp.maximum(pool_f, 0.0), pool_f)
    pool_b = jnp.where(short, jnp.maximum(pool_b, 0.0), pool_b)

    pooled = jnp.concatenate([pool_f, pool_b], axis=1).astype(jnp.bfloat16)

    # relu_mlp: Linear(2H, M) -> ReLU.  TODO(synk): dropout = identity (eval).
    mlp = jnp.maximum(
        jnp.dot(pooled, w_mlp_ref[...], preferred_element_type=jnp.float32)
        + b_mlp_ref[...], 0.0)

    # decoder: Linear(M, C_pad) -> Softmax.  Padded classes have a -1e9 bias
    # so exp() underflows to exactly 0.  Denominator uses an EXACT division
    # (approx reciprocal broke the row-sum check).
    logits = (jnp.dot(mlp.astype(jnp.bfloat16), w_dec_ref[...],
                      preferred_element_type=jnp.float32) + b_dec_ref[...])
    m = jnp.max(logits, axis=-1, keepdims=True)
    e = jnp.exp(logits - m)
    denom = jnp.sum(e, axis=-1, keepdims=True)
    out_ref[...] = e / denom


# ------------------------------ JAX wrapper ----------------------------------
def _permute_gates(w):
    """Permute last-dim gate blocks from PyTorch [i, f, g, o] to [i, f, o, g]."""
    i, f, g, o = jnp.split(w, 4, axis=-1)
    return jnp.concatenate([i, f, o, g], axis=-1)


def lstm_extractor_forward(params, sents, entdists, numdists, *, block_b=128):
    B, T = sents.shape
    H = params["whh_f"].shape[0]
    Cls = params["w_dec"].shape[1]
    Mh = params["w_mlp"].shape[1]

    # Embedding lookups + concat (glue, plain JAX gathers).
    emb_sents = params["word_emb"][sents]                 # (B, T, WH)
    emb_ent = params["ent_emb"][entdists]                 # (B, T, DH)
    emb_num = params["num_emb"][numdists]                 # (B, T, DH)
    emb_cat = jnp.concatenate([emb_sents, emb_ent, emb_num], axis=2)   # (B,T,D)
    D = emb_cat.shape[-1]

    # packed-sequence lengths (token id 0 == padding, assumed tail-padded)
    lengths = jnp.sum(sents > 0, axis=1).astype(jnp.int32)            # (B,)
    max_len = jnp.maximum(jnp.max(lengths), 1).astype(jnp.int32).reshape(1)

    # Batch tile: multiple of 16 (bf16 sublane packing) so the in-kernel
    # (T, Bt, D) -> (T*Bt, D) collapse is tile-aligned.
    # TODO(synk): pick Bt per generation (256 v6e/v7x, 128 v5e) via get_tpu_info.
    Bt = block_b if B >= block_b else _round_up(max(B, 1), 16)
    B_pad = _round_up(B, Bt)
    n_tiles = B_pad // Bt

    emb_cat = jnp.pad(emb_cat, ((0, B_pad - B), (0, 0), (0, 0)))
    lens_pad = jnp.pad(lengths, (0, B_pad - B)).reshape(B_pad, 1)

    # Time-major (T, B_pad, D) bf16 so the grid can block the batch axis.
    emb_tmd = jnp.transpose(emb_cat, (1, 0, 2)).astype(jnp.bfloat16)

    # Pack both directions' input weights/biases (gate columns pre-permuted).
    wih = jnp.concatenate([_permute_gates(params["wih_f"]),
                           _permute_gates(params["wih_b"])],
                          axis=1).astype(jnp.bfloat16)                 # (D, 8H)
    b_x = jnp.concatenate([_permute_gates(params["b_f"]),
                           _permute_gates(params["b_b"])],
                          axis=1).astype(jnp.float32)                  # (1, 8H)
    whh_f = _permute_gates(params["whh_f"]).astype(jnp.bfloat16)
    whh_b = _permute_gates(params["whh_b"]).astype(jnp.bfloat16)
    w_mlp = params["w_mlp"].astype(jnp.bfloat16)
    b_mlp = params["b_mlp"].astype(jnp.float32)

    # Pad decoder classes to a lane multiple for a dense (unmasked) out store.
    C_pad = _round_up(Cls, 128)
    w_dec = jnp.pad(params["w_dec"], ((0, 0), (0, C_pad - Cls))).astype(jnp.bfloat16)
    b_dec = jnp.pad(params["b_dec"], ((0, 0), (0, C_pad - Cls)),
                    constant_values=-1e9).astype(jnp.float32)

    grid_spec = pltpu.PrefetchScalarGridSpec(
        num_scalar_prefetch=1,                 # max_len -> SMEM
        grid=(n_tiles,),
        in_specs=[
            pl.BlockSpec((Bt, 1), lambda i, ml: (i, 0)),          # lengths
            pl.BlockSpec((T, Bt, D), lambda i, ml: (0, i, 0)),    # emb (time-major)
            pl.BlockSpec((D, 8 * H), lambda i, ml: (0, 0)),       # wih (resident)
            pl.BlockSpec((1, 8 * H), lambda i, ml: (0, 0)),       # b_x
            pl.BlockSpec((H, 4 * H), lambda i, ml: (0, 0)),       # whh_f
            pl.BlockSpec((H, 4 * H), lambda i, ml: (0, 0)),       # whh_b
            pl.BlockSpec((2 * H, Mh), lambda i, ml: (0, 0)),      # w_mlp
            pl.BlockSpec((1, Mh), lambda i, ml: (0, 0)),          # b_mlp
            pl.BlockSpec((Mh, C_pad), lambda i, ml: (0, 0)),      # w_dec
            pl.BlockSpec((1, C_pad), lambda i, ml: (0, 0)),       # b_dec
        ],
        out_specs=pl.BlockSpec((Bt, C_pad), lambda i, ml: (i, 0)),
        scratch_shapes=[
            pltpu.VMEM((T * Bt, 4 * H), jnp.float32),             # gx forward
            pltpu.VMEM((T * Bt, 4 * H), jnp.float32),             # gx backward
            pltpu.VMEM((Bt, H), jnp.float32),                     # h_f
            pltpu.VMEM((Bt, H), jnp.float32),                     # c_f
            pltpu.VMEM((Bt, H), jnp.float32),                     # pool_f
            pltpu.VMEM((Bt, H), jnp.float32),                     # h_b
            pltpu.VMEM((Bt, H), jnp.float32),                     # c_b
            pltpu.VMEM((Bt, H), jnp.float32),                     # pool_b
        ],
    )

    # Resident-VMEM estimate (double-buffered blocks + weights + scratch).
    est = (2 * T * Bt * D * 2
           + 2 * Bt * C_pad * 4
           + (D * 8 * H + 2 * H * 4 * H + 2 * H * Mh + Mh * C_pad) * 2
           + (8 * H + Mh + C_pad) * 4
           + 2 * T * Bt * 4 * H * 4
           + 6 * Bt * H * 4)
    vmem_limit = int(min(max(2 * est, 32 * 1024 * 1024), 64 * 1024 * 1024))

    out = pl.pallas_call(
        lstm_extractor_kernel,
        out_shape=jax.ShapeDtypeStruct((B_pad, C_pad), jnp.float32),
        grid_spec=grid_spec,
        compiler_params=pltpu.CompilerParams(
            dimension_semantics=("parallel",),
            vmem_limit_bytes=vmem_limit),
    )(max_len, lens_pad, emb_tmd, wih, b_x, whh_f, whh_b,
      w_mlp, b_mlp, w_dec, b_dec)

    return out[:B, :Cls]


# ----------------------- pure-JAX f32 reference (spec) ------------------------
def reference_forward(params, sents, entdists, numdists):
    emb = jnp.concatenate([params["word_emb"][sents],
                           params["ent_emb"][entdists],
                           params["num_emb"][numdists]], axis=2)       # (B,T,D)
    B, T, _ = emb.shape
    H = params["whh_f"].shape[0]
    lengths = jnp.sum(sents > 0, axis=1).astype(jnp.int32)
    max_len = jnp.maximum(jnp.max(lengths), 1)

    def cell(x_t, h, c, wih, whh, b):
        gates = x_t @ wih + h @ whh + b                  # PyTorch order i,f,g,o
        i = jax.nn.sigmoid(gates[:, 0 * H:1 * H])
        f = jax.nn.sigmoid(gates[:, 1 * H:2 * H])
        g = jnp.tanh(gates[:, 2 * H:3 * H])
        o = jax.nn.sigmoid(gates[:, 3 * H:4 * H])
        c_new = f * c + i * g
        return o * jnp.tanh(c_new), c_new

    neg = -jnp.inf
    pool_f = jnp.full((B, H), neg)
    pool_b = jnp.full((B, H), neg)

    h = jnp.zeros((B, H)); c = jnp.zeros((B, H))
    for t in range(T):                                   # forward direction
        hn, cn = cell(emb[:, t], h, c, params["wih_f"], params["whh_f"], params["b_f"])
        valid = (t < lengths)[:, None]
        h = jnp.where(valid, hn, h); c = jnp.where(valid, cn, c)
        pool_f = jnp.maximum(pool_f, jnp.where(valid, h, neg))

    h = jnp.zeros((B, H)); c = jnp.zeros((B, H))
    for t in reversed(range(T)):                         # backward direction
        hn, cn = cell(emb[:, t], h, c, params["wih_b"], params["whh_b"], params["b_b"])
        valid = (t < lengths)[:, None]
        h = jnp.where(valid, hn, h); c = jnp.where(valid, cn, c)
        pool_b = jnp.maximum(pool_b, jnp.where(valid, h, neg))

    short = (lengths < max_len)[:, None]
    pool_f = jnp.where(short, jnp.maximum(pool_f, 0.0), pool_f)
    pool_b = jnp.where(short, jnp.maximum(pool_b, 0.0), pool_b)
    pooled = jnp.concatenate([pool_f, pool_b], axis=1)

    mlp = jnp.maximum(pooled @ params["w_mlp"] + params["b_mlp"], 0.0)
    logits = mlp @ params["w_dec"] + params["b_dec"]
    return jax.nn.softmax(logits, axis=-1)


# -------------------------- deterministic params -----------------------------
def make_params(key, word_input_size, ent_dist_size, num_dist_size,
                word_hidden, dist_hidden, lstm_hidden, mlp_hidden, num_types):
    D = word_hidden + 2 * dist_hidden
    H = lstm_hidden
    ks = jax.random.split(key, 16)
    s = 0.1
    f32 = jnp.float32
    return {
        "word_emb": (jax.random.normal(ks[0], (word_input_size, word_hidden)) * s).astype(f32),
        "ent_emb":  (jax.random.normal(ks[1], (ent_dist_size, dist_hidden)) * s).astype(f32),
        "num_emb":  (jax.random.normal(ks[2], (num_dist_size, dist_hidden)) * s).astype(f32),
        # LSTM weights stored (in_dim, 4H), PyTorch gate order i, f, g, o.
        # (The wrapper permutes columns to [i, f, o, g] for the kernel.)
        "wih_f": (jax.random.normal(ks[3], (D, 4 * H)) * s).astype(f32),
        "whh_f": (jax.random.normal(ks[4], (H, 4 * H)) * s).astype(f32),
        "b_f":   (jax.random.normal(ks[5], (1, 4 * H)) * s).astype(f32),
        "wih_b": (jax.random.normal(ks[6], (D, 4 * H)) * s).astype(f32),
        "whh_b": (jax.random.normal(ks[7], (H, 4 * H)) * s).astype(f32),
        "b_b":   (jax.random.normal(ks[8], (1, 4 * H)) * s).astype(f32),
        "w_mlp": (jax.random.normal(ks[9], (2 * H, mlp_hidden)) * s).astype(f32),
        "b_mlp": (jax.random.normal(ks[10], (1, mlp_hidden)) * s).astype(f32),
        "w_dec": (jax.random.normal(ks[11], (mlp_hidden, num_types)) * s).astype(f32),
        "b_dec": (jax.random.normal(ks[12], (1, num_types)) * s).astype(f32),
    }


# ---------------------------------- main --------------------------------------
if __name__ == "__main__":
    # Small, TPU-friendly hyperparameters consistent with the module structure.
    B, T = 2, 8
    WORD_VOCAB, ENT_VOCAB, NUM_VOCAB = 50, 20, 20
    WORD_HIDDEN, DIST_HIDDEN = 64, 32          # -> input width D = 128
    LSTM_HIDDEN = 128                          # bidirectional -> 256 features
    MLP_HIDDEN = 256
    NUM_TYPES = 40

    key = jax.random.PRNGKey(0)
    k_params, k_tok, k_ent, k_num = jax.random.split(key, 4)

    params = make_params(k_params, WORD_VOCAB, ENT_VOCAB, NUM_VOCAB,
                         WORD_HIDDEN, DIST_HIDDEN, LSTM_HIDDEN,
                         MLP_HIDDEN, NUM_TYPES)

    # Variable-length word sequences (0 = padding token at the tail).
    true_lengths = jnp.array([T, T - 3], dtype=jnp.int32)
    tok = jax.random.randint(k_tok, (B, T), 1, WORD_VOCAB, dtype=jnp.int32)
    pos = jnp.arange(T, dtype=jnp.int32)[None, :]
    sents = jnp.where(pos < true_lengths[:, None], tok, 0)
    entdists = jax.random.randint(k_ent, (B, T), 0, ENT_VOCAB, dtype=jnp.int32)
    numdists = jax.random.randint(k_num, (B, T), 0, NUM_VOCAB, dtype=jnp.int32)

    out = lstm_extractor_forward(params, sents, entdists, numdists)
    out = jax.block_until_ready(out)

    assert out.shape == (B, NUM_TYPES)
    assert bool(jnp.all(jnp.isfinite(out)))
    # exact softmax division -> each row sums to 1 up to f32 rounding
    assert bool(jnp.allclose(jnp.sum(out, axis=-1), 1.0, atol=1e-3))

    # f32 pure-JAX reference of the PyTorch forward; loose tolerance because
    # the kernel intentionally uses bf16 matmul operands.
    ref = reference_forward(params, sents, entdists, numdists)
    assert bool(jnp.max(jnp.abs(out - ref)) < 3e-2)

    print("KERNEL_OK")
</pallas_src>

<mosaic_0001>
module attributes {stable_mosaic.version = 11 : i64} {
  func.func @lstm_extractor_kernel(%arg0: i32, %arg1: memref<1xi32, #tpu.memory_space<smem>>, %arg2: memref<16x1xi32, #tpu.memory_space<vmem>>, %arg3: memref<8x16x128xbf16, #tpu.memory_space<vmem>>, %arg4: memref<128x1024xbf16, #tpu.memory_space<vmem>>, %arg5: memref<1x1024xf32, #tpu.memory_space<vmem>>, %arg6: memref<128x512xbf16, #tpu.memory_space<vmem>>, %arg7: memref<128x512xbf16, #tpu.memory_space<vmem>>, %arg8: memref<256x256xbf16, #tpu.memory_space<vmem>>, %arg9: memref<1x256xf32, #tpu.memory_space<vmem>>, %arg10: memref<256x128xbf16, #tpu.memory_space<vmem>>, %arg11: memref<1x128xf32, #tpu.memory_space<vmem>>, %arg12: memref<16x128xf32, #tpu.memory_space<vmem>>, %arg13: memref<128x512xf32, #tpu.memory_space<vmem>>, %arg14: memref<128x512xf32, #tpu.memory_space<vmem>>, %arg15: memref<16x128xf32, #tpu.memory_space<vmem>>, %arg16: memref<16x128xf32, #tpu.memory_space<vmem>>, %arg17: memref<16x128xf32, #tpu.memory_space<vmem>>, %arg18: memref<16x128xf32, #tpu.memory_space<vmem>>, %arg19: memref<16x128xf32, #tpu.memory_space<vmem>>, %arg20: memref<16x128xf32, #tpu.memory_space<vmem>>) attributes {dimension_semantics = [#tpu.dimension_semantics<parallel>], iteration_bounds = array<i64: 1>, scalar_prefetch = 1 : i64, scratch_operands = 8 : i64, tpu.core_type = #tpu.core_type<tc>, window_params = [{transform_indices = @transform_0, window_bounds = array<i64: 16, 1>}, {transform_indices = @transform_1, window_bounds = array<i64: 8, 16, 128>}, {pipeline_mode = #tpu.pipeline_mode<synchronous>, transform_indices = @transform_2, window_bounds = array<i64: 128, 1024>}, {pipeline_mode = #tpu.pipeline_mode<synchronous>, transform_indices = @transform_3, window_bounds = array<i64: 1, 1024>}, {pipeline_mode = #tpu.pipeline_mode<synchronous>, transform_indices = @transform_4, window_bounds = array<i64: 128, 512>}, {pipeline_mode = #tpu.pipeline_mode<synchronous>, transform_indices = @transform_5, window_bounds = array<i64: 128, 512>}, {pipeline_mode = #tpu.pipeline_mode<synchronous>, transform_indices = @transform_6, window_bounds = array<i64: 256, 256>}, {pipeline_mode = #tpu.pipeline_mode<synchronous>, transform_indices = @transform_7, window_bounds = array<i64: 1, 256>}, {pipeline_mode = #tpu.pipeline_mode<synchronous>, transform_indices = @transform_8, window_bounds = array<i64: 256, 128>}, {pipeline_mode = #tpu.pipeline_mode<synchronous>, transform_indices = @transform_9, window_bounds = array<i64: 1, 128>}, {transform_indices = @transform_10, window_bounds = array<i64: 16, 128>}]} {
    %c0 = arith.constant 0 : index
    %c0_0 = arith.constant 0 : index
    %c0_1 = arith.constant 0 : index
    %0 = vector.load %arg3[%c0, %c0_0, %c0_1] : memref<8x16x128xbf16, #tpu.memory_space<vmem>>, vector<8x16x128xbf16>
    %1 = vector.shape_cast %0 : vector<8x16x128xbf16> to vector<128x128xbf16>
    %c0_2 = arith.constant 0 : index
    %c0_3 = arith.constant 0 : index
    %2 = vector.load %arg4[%c0_2, %c0_3] : memref<128x1024xbf16, #tpu.memory_space<vmem>>, vector<128x1024xbf16>
    %cst = arith.constant dense<0.000000e+00> : vector<128x1024xf32>
    %3 = tpu.matmul %1, %2, %cst {dimension_numbers = #tpu.dot_dimension_numbers<[1], [0], [0], [1], [0, 0, 1, 1], [], []>} : vector<128x128xbf16>, vector<128x1024xbf16>, vector<128x1024xf32> -> vector<128x1024xf32>
    %c0_4 = arith.constant 0 : index
    %c0_5 = arith.constant 0 : index
    %4 = vector.load %arg5[%c0_4, %c0_5] : memref<1x1024xf32, #tpu.memory_space<vmem>>, vector<1x1024xf32>
    %5 = vector.broadcast %4 : vector<1x1024xf32> to vector<128x1024xf32>
    %6 = arith.addf %3, %5 : vector<128x1024xf32>
    %7 = vector.extract_strided_slice %6 {offsets = [0, 0], sizes = [128, 512], strides = [1, 1]} : vector<128x1024xf32> to vector<128x512xf32>
    %c0_6 = arith.constant 0 : index
    %c0_7 = arith.constant 0 : index
    %8 = vector.load %arg13[%c0_6, %c0_7] : memref<128x512xf32, #tpu.memory_space<vmem>>, vector<128x512xf32>
    tpu.vector_store %arg13[%c0_6, %c0_7], %7 {strides = array<i32>} : memref<128x512xf32, #tpu.memory_space<vmem>>, vector<128x512xf32>,
    %9 = vector.extract_strided_slice %6 {offsets = [0, 512], sizes = [128, 512], strides = [1, 1]} : vector<128x1024xf32> to vector<128x512xf32>
    %c0_8 = arith.constant 0 : index
    %c0_9 = arith.constant 0 : index
    %10 = vector.load %arg14[%c0_8, %c0_9] : memref<128x512xf32, #tpu.memory_space<vmem>>, vector<128x512xf32>
    tpu.vector_store %arg14[%c0_8, %c0_9], %9 {strides = array<i32>} : memref<128x512xf32, #tpu.memory_space<vmem>>, vector<128x512xf32>,
    %cst_10 = arith.constant 0.000000e+00 : f32
    %11 = vector.broadcast %cst_10 : f32 to vector<16x128xf32>
    %c0_11 = arith.constant 0 : index
    %c0_12 = arith.constant 0 : index
    %12 = vector.load %arg15[%c0_11, %c0_12] : memref<16x128xf32, #tpu.memory_space<vmem>>, vector<16x128xf32>
    tpu.vector_store %arg15[%c0_11, %c0_12], %11 {strides = array<i32>} : memref<16x128xf32, #tpu.memory_space<vmem>>, vector<16x128xf32>,
    %c0_13 = arith.constant 0 : index
    %c0_14 = arith.constant 0 : index
    %13 = vector.load %arg16[%c0_13, %c0_14] : memref<16x128xf32, #tpu.memory_space<vmem>>, vector<16x128xf32>
    tpu.vector_store %arg16[%c0_13, %c0_14], %11 {strides = array<i32>} : memref<16x128xf32, #tpu.memory_space<vmem>>, vector<16x128xf32>,
    %c0_15 = arith.constant 0 : index
    %c0_16 = arith.constant 0 : index
    %14 = vector.load %arg18[%c0_15, %c0_16] : memref<16x128xf32, #tpu.memory_space<vmem>>, vector<16x128xf32>
    tpu.vector_store %arg18[%c0_15, %c0_16], %11 {strides = array<i32>} : memref<16x128xf32, #tpu.memory_space<vmem>>, vector<16x128xf32>,
    %c0_17 = arith.constant 0 : index
    %c0_18 = arith.constant 0 : index
    %15 = vector.load %arg19[%c0_17, %c0_18] : memref<16x128xf32, #tpu.memory_space<vmem>>, vector<16x128xf32>
    tpu.vector_store %arg19[%c0_17, %c0_18], %11 {strides = array<i32>} : memref<16x128xf32, #tpu.memory_space<vmem>>, vector<16x128xf32>,
    %cst_19 = arith.constant 0xFF800000 : f32
    %16 = vector.broadcast %cst_19 : f32 to vector<16x128xf32>
    %c0_20 = arith.constant 0 : index
    %c0_21 = arith.constant 0 : index
    %17 = vector.load %arg17[%c0_20, %c0_21] : memref<16x128xf32, #tpu.memory_space<vmem>>, vector<16x128xf32>
    tpu.vector_store %arg17[%c0_20, %c0_21], %16 {strides = array<i32>} : memref<16x128xf32, #tpu.memory_space<vmem>>, vector<16x128xf32>,
    %cst_22 = arith.constant 0xFF800000 : f32
    %18 = vector.broadcast %cst_22 : f32 to vector<16x128xf32>
    %c0_23 = arith.constant 0 : index
    %c0_24 = arith.constant 0 : index
    %19 = vector.load %arg20[%c0_23, %c0_24] : memref<16x128xf32, #tpu.memory_space<vmem>>, vector<16x128xf32>
    tpu.vector_store %arg20[%c0_23, %c0_24], %18 {strides = array<i32>} : memref<16x128xf32, #tpu.memory_space<vmem>>, vector<16x128xf32>,
    %c0_25 = arith.constant 0 : index
    %c0_26 = arith.constant 0 : index
    %20 = vector.load %arg2[%c0_25, %c0_26] : memref<16x1xi32, #tpu.memory_space<vmem>>, vector<16x1xi32>
    %c0_27 = arith.constant 0 : index
    %21 = memref.load %arg1[%c0_27] : memref<1xi32, #tpu.memory_space<smem>>
    %c0_28 = arith.constant 0 : index
    %c0_29 = arith.constant 0 : index
    %22 = vector.load %arg6[%c0_28, %c0_29] : memref<128x512xbf16, #tpu.memory_space<vmem>>, vector<128x512xbf16>
    %c0_30 = arith.constant 0 : index
    %c0_31 = arith.constant 0 : index
    %23 = vector.load %arg7[%c0_30, %c0_31] : memref<128x512xbf16, #tpu.memory_space<vmem>>, vector<128x512xbf16>
    %c0_i32 = arith.constant 0 : i32
    %cst_32 = arith.constant 0xFF800000 : f32
    %c0_i32_33 = arith.constant 0 : i32
    %24 = arith.subi %21, %c0_i32_33 : i32
    %25 = arith.addi %c0_i32_33, %24 : i32
    %c1_i32 = arith.constant 1 : i32
    scf.for %arg21 = %c0_i32_33 to %25 step %c1_i32  : i32 {
      %c1_i32_55 = arith.constant 1 : i32
      %65 = arith.subi %21, %c1_i32_55 : i32
      %66 = arith.subi %65, %arg21 : i32
      %c16_i32 = arith.constant 16 : i32
      %67 = arith.muli %arg21, %c16_i32 : i32
      %68 = tpu.assume_multiple %67, 16 : i32
      %69 = arith.index_cast %68 : i32 to index
      %c0_56 = arith.constant 0 : index
      %70 = vector.load %arg13[%69, %c0_56] : memref<128x512xf32, #tpu.memory_space<vmem>>, vector<16x512xf32>
      %c16_i32_57 = arith.constant 16 : i32
      %71 = arith.muli %66, %c16_i32_57 : i32
      %72 = tpu.assume_multiple %71, 16 : i32
      %73 = arith.index_cast %72 : i32 to index
      %c0_58 = arith.constant 0 : index
      %74 = vector.load %arg14[%73, %c0_58] : memref<128x512xf32, #tpu.memory_space<vmem>>, vector<16x512xf32>
      %c0_59 = arith.constant 0 : index
      %c0_60 = arith.constant 0 : index
      %75 = vector.load %arg15[%c0_59, %c0_60] : memref<16x128xf32, #tpu.memory_space<vmem>>, vector<16x128xf32>
      %c0_61 = arith.constant 0 : index
      %c0_62 = arith.constant 0 : index
      %76 = vector.load %arg16[%c0_61, %c0_62] : memref<16x128xf32, #tpu.memory_space<vmem>>, vector<16x128xf32>
      %c0_63 = arith.constant 0 : index
      %c0_64 = arith.constant 0 : index
      %77 = vector.load %arg18[%c0_63, %c0_64] : memref<16x128xf32, #tpu.memory_space<vmem>>, vector<16x128xf32>
      %c0_65 = arith.constant 0 : index
      %c0_66 = arith.constant 0 : index
      %78 = vector.load %arg19[%c0_65, %c0_66] : memref<16x128xf32, #tpu.memory_space<vmem>>, vector<16x128xf32>
      %79 = arith.truncf %75 : vector<16x128xf32> to vector<16x128xbf16>
      %cst_67 = arith.constant dense<0.000000e+00> : vector<16x512xf32>
      %80 = tpu.matmul %79, %22, %cst_67 {dimension_numbers = #tpu.dot_dimension_numbers<[1], [0], [0], [1], [0, 0, 1, 1], [], []>} : vector<16x128xbf16>, vector<128x512xbf16>, vector<16x512xf32> -> vector<16x512xf32>
      %81 = arith.truncf %77 : vector<16x128xf32> to vector<16x128xbf16>
      %cst_68 = arith.constant dense<0.000000e+00> : vector<16x512xf32>
      %82 = tpu.matmul %81, %23, %cst_68 {dimension_numbers = #tpu.dot_dimension_numbers<[1], [0], [0], [1], [0, 0, 1, 1], [], []>} : vector<16x128xbf16>, vector<128x512xbf16>, vector<16x512xf32> -> vector<16x512xf32>
      %83 = arith.addf %70, %80 : vector<16x512xf32>
      %84 = vector.extract_strided_slice %83 {offsets = [0, 0], sizes = [16, 384], strides = [1, 1]} : vector<16x512xf32> to vector<16x384xf32>
      %85 = arith.negf %84 : vector<16x384xf32>
      %86 = math.exp %85 : vector<16x384xf32>
      %cst_69 = arith.constant 1.000000e+00 : f32
      %87 = vector.broadcast %cst_69 : f32 to vector<16x384xf32>
      %88 = arith.addf %87, %86 : vector<16x384xf32>
      %89 = arith.divf %87, %88 : vector<16x384xf32>
      %90 = vector.extract_strided_slice %83 {offsets = [0, 384], sizes = [16, 128], strides = [1, 1]} : vector<16x512xf32> to vector<16x128xf32>
      %91 = math.tanh %90 : vector<16x128xf32>
      %92 = vector.extract_strided_slice %89 {offsets = [0, 0], sizes = [16, 128], strides = [1, 1]} : vector<16x384xf32> to vector<16x128xf32>
      %93 = vector.extract_strided_slice %89 {offsets = [0, 128], sizes = [16, 128], strides = [1, 1]} : vector<16x384xf32> to vector<16x128xf32>
      %94 = vector.extract_strided_slice %89 {offsets = [0, 256], sizes = [16, 128], strides = [1, 1]} : vector<16x384xf32> to vector<16x128xf32>
      %95 = arith.mulf %93, %76 : vector<16x128xf32>
      %96 = arith.mulf %92, %91 : vector<16x128xf32>
      %97 = arith.addf %95, %96 : vector<16x128xf32>
      %98 = math.tanh %97 : vector<16x128xf32>
      %99 = arith.mulf %94, %98 : vector<16x128xf32>
      %100 = arith.addf %74, %82 : vector<16x512xf32>
      %101 = vector.extract_strided_slice %100 {offsets = [0, 0], sizes = [16, 384], strides = [1, 1]} : vector<16x512xf32> to vector<16x384xf32>
      %102 = arith.negf %101 : vector<16x384xf32>
      %103 = math.exp %102 : vector<16x384xf32>
      %cst_70 = arith.constant 1.000000e+00 : f32
      %104 = vector.broadcast %cst_70 : f32 to vector<16x384xf32>
      %105 = arith.addf %104, %103 : vector<16x384xf32>
      %106 = arith.divf %104, %105 : vector<16x384xf32>
      %107 = vector.extract_strided_slice %100 {offsets = [0, 384], sizes = [16, 128], strides = [1, 1]} : vector<16x512xf32> to vector<16x128xf32>
      %108 = math.tanh %107 : vector<16x128xf32>
      %109 = vector.extract_strided_slice %106 {offsets = [0, 0], sizes = [16, 128], strides = [1, 1]} : vector<16x384xf32> to vector<16x128xf32>
      %110 = vector.extract_strided_slice %106 {offsets = [0, 128], sizes = [16, 128], strides = [1, 1]} : vector<16x384xf32> to vector<16x128xf32>
      %111 = vector.extract_strided_slice %106 {offsets = [0, 256], sizes = [16, 128], strides = [1, 1]} : vector<16x384xf32> to vector<16x128xf32>
      %112 = arith.mulf %110, %78 : vector<16x128xf32>
      %113 = arith.mulf %109, %108 : vector<16x128xf32>
      %114 = arith.addf %112, %113 : vector<16x128xf32>
      %115 = math.tanh %114 : vector<16x128xf32>
      %116 = arith.mulf %111, %115 : vector<16x128xf32>
      %117 = vector.broadcast %arg21 : i32 to vector<16x1xi32>
      %118 = arith.cmpi slt, %117, %20 : vector<16x1xi32>
      %119 = vector.broadcast %66 : i32 to vector<16x1xi32>
      %120 = arith.cmpi slt, %119, %20 : vector<16x1xi32>
      %121 = vector.shape_cast %118 : vector<16x1xi1> to vector<16x1xi1>
      %122 = vector.broadcast %121 : vector<16x1xi1> to vector<16x128xi1>
      %123 = arith.select %122, %99, %75 : vector<16x128xi1>, vector<16x128xf32>
      %124 = vector.shape_cast %118 : vector<16x1xi1> to vector<16x1xi1>
      %125 = vector.broadcast %124 : vector<16x1xi1> to vector<16x128xi1>
      %126 = arith.select %125, %97, %76 : vector<16x128xi1>, vector<16x128xf32>
      %127 = vector.shape_cast %120 : vector<16x1xi1> to vector<16x1xi1>
      %128 = vector.broadcast %127 : vector<16x1xi1> to vector<16x128xi1>
      %129 = arith.select %128, %116, %77 : vector<16x128xi1>, vector<16x128xf32>
      %130 = vector.shape_cast %120 : vector<16x1xi1> to vector<16x1xi1>
      %131 = vector.broadcast %130 : vector<16x1xi1> to vector<16x128xi1>
      %132 = arith.select %131, %114, %78 : vector<16x128xi1>, vector<16x128xf32>
      %c0_71 = arith.constant 0 : index
      %c0_72 = arith.constant 0 : index
      %133 = vector.load %arg15[%c0_71, %c0_72] : memref<16x128xf32, #tpu.memory_space<vmem>>, vector<16x128xf32>
      tpu.vector_store %arg15[%c0_71, %c0_72], %123 {strides = array<i32>} : memref<16x128xf32, #tpu.memory_space<vmem>>, vector<16x128xf32>,
      %c0_73 = arith.constant 0 : index
      %c0_74 = arith.constant 0 : index
      %134 = vector.load %arg16[%c0_73, %c0_74] : memref<16x128xf32, #tpu.memory_space<vmem>>, vector<16x128xf32>
      tpu.vector_store %arg16[%c0_73, %c0_74], %126 {strides = array<i32>} : memref<16x128xf32, #tpu.memory_space<vmem>>, vector<16x128xf32>,
      %c0_75 = arith.constant 0 : index
      %c0_76 = arith.constant 0 : index
      %135 = vector.load %arg18[%c0_75, %c0_76] : memref<16x128xf32, #tpu.memory_space<vmem>>, vector<16x128xf32>
      tpu.vector_store %arg18[%c0_75, %c0_76], %129 {strides = array<i32>} : memref<16x128xf32, #tpu.memory_space<vmem>>, vector<16x128xf32>,
      %c0_77 = arith.constant 0 : index
      %c0_78 = arith.constant 0 : index
      %136 = vector.load %arg19[%c0_77, %c0_78] : memref<16x128xf32, #tpu.memory_space<vmem>>, vector<16x128xf32>
      tpu.vector_store %arg19[%c0_77, %c0_78], %132 {strides = array<i32>} : memref<16x128xf32, #tpu.memory_space<vmem>>, vector<16x128xf32>,
      %c0_79 = arith.constant 0 : index
      %c0_80 = arith.constant 0 : index
      %137 = vector.load %arg17[%c0_79, %c0_80] : memref<16x128xf32, #tpu.memory_space<vmem>>, vector<16x128xf32>
      %138 = vector.shape_cast %118 : vector<16x1xi1> to vector<16x1xi1>
      %139 = vector.broadcast %138 : vector<16x1xi1> to vector<16x128xi1>
      %140 = vector.broadcast %cst_32 : f32 to vector<16x128xf32>
      %141 = arith.select %139, %123, %140 : vector<16x128xi1>, vector<16x128xf32>
      %142 = arith.maximumf %137, %141 : vector<16x128xf32>
      %c0_81 = arith.constant 0 : index
      %c0_82 = arith.constant 0 : index
      %143 = vector.load %arg17[%c0_81, %c0_82] : memref<16x128xf32, #tpu.memory_space<vmem>>, vector<16x128xf32>
      tpu.vector_store %arg17[%c0_81, %c0_82], %142 {strides = array<i32>} : memref<16x128xf32, #tpu.memory_space<vmem>>, vector<16x128xf32>,
      %c0_83 = arith.constant 0 : index
      %c0_84 = arith.constant 0 : index
      %144 = vector.load %arg20[%c0_83, %c0_84] : memref<16x128xf32, #tpu.memory_space<vmem>>, vector<16x128xf32>
      %145 = vector.shape_cast %120 : vector<16x1xi1> to vector<16x1xi1>
      %146 = vector.broadcast %145 : vector<16x1xi1> to vector<16x128xi1>
      %147 = vector.broadcast %cst_32 : f32 to vector<16x128xf32>
      %148 = arith.select %146, %129, %147 : vector<16x128xi1>, vector<16x128xf32>
      %149 = arith.maximumf %144, %148 : vector<16x128xf32>
      %c0_85 = arith.constant 0 : index
      %c0_86 = arith.constant 0 : index
      %150 = vector.load %arg20[%c0_85, %c0_86] : memref<16x128xf32, #tpu.memory_space<vmem>>, vector<16x128xf32>
      tpu.vector_store %arg20[%c0_85, %c0_86], %149 {strides = array<i32>} : memref<16x128xf32, #tpu.memory_space<vmem>>, vector<16x128xf32>,
    }
    %c0_34 = arith.constant 0 : index
    %c0_35 = arith.constant 0 : index
    %26 = vector.load %arg17[%c0_34, %c0_35] : memref<16x128xf32, #tpu.memory_space<vmem>>, vector<16x128xf32>
    %c0_36 = arith.constant 0 : index
    %c0_37 = arith.constant 0 : index
    %27 = vector.load %arg20[%c0_36, %c0_37] : memref<16x128xf32, #tpu.memory_space<vmem>>, vector<16x128xf32>
    %28 = vector.broadcast %21 : i32 to vector<16x1xi32>
    %29 = arith.cmpi slt, %20, %28 : vector<16x1xi32>
    %cst_38 = arith.constant 0.000000e+00 : f32
    %30 = vector.broadcast %cst_38 : f32 to vector<16x128xf32>
    %31 = arith.maximumf %26, %30 : vector<16x128xf32>
    %32 = vector.shape_cast %29 : vector<16x1xi1> to vector<16x1xi1>
    %33 = vector.broadcast %32 : vector<16x1xi1> to vector<16x128xi1>
    %34 = arith.select %33, %31, %26 : vector<16x128xi1>, vector<16x128xf32>
    %cst_39 = arith.constant 0.000000e+00 : f32
    %35 = vector.broadcast %cst_39 : f32 to vector<16x128xf32>
    %36 = arith.maximumf %27, %35 : vector<16x128xf32>
    %37 = vector.shape_cast %29 : vector<16x1xi1> to vector<16x1xi1>
    %38 = vector.broadcast %37 : vector<16x1xi1> to vector<16x128xi1>
    %39 = arith.select %38, %36, %27 : vector<16x128xi1>, vector<16x128xf32>
    %40 = tpu.concatenate %34, %39 in 1 : vector<16x128xf32>, vector<16x128xf32> -> vector<16x256xf32>
    %41 = arith.truncf %40 : vector<16x256xf32> to vector<16x256xbf16>
    %c0_40 = arith.constant 0 : index
    %c0_41 = arith.constant 0 : index
    %42 = vector.load %arg8[%c0_40, %c0_41] : memref<256x256xbf16, #tpu.memory_space<vmem>>, vector<256x256xbf16>
    %cst_42 = arith.constant dense<0.000000e+00> : vector<16x256xf32>
    %43 = tpu.matmul %41, %42, %cst_42 {dimension_numbers = #tpu.dot_dimension_numbers<[1], [0], [0], [1], [0, 0, 1, 1], [], []>} : vector<16x256xbf16>, vector<256x256xbf16>, vector<16x256xf32> -> vector<16x256xf32>
    %c0_43 = arith.constant 0 : index
    %c0_44 = arith.constant 0 : index
    %44 = vector.load %arg9[%c0_43, %c0_44] : memref<1x256xf32, #tpu.memory_space<vmem>>, vector<1x256xf32>
    %45 = vector.broadcast %44 : vector<1x256xf32> to vector<16x256xf32>
    %46 = arith.addf %43, %45 : vector<16x256xf32>
    %cst_45 = arith.constant 0.000000e+00 : f32
    %47 = vector.broadcast %cst_45 : f32 to vector<16x256xf32>
    %48 = arith.maximumf %46, %47 : vector<16x256xf32>
    %49 = arith.truncf %48 : vector<16x256xf32> to vector<16x256xbf16>
    %c0_46 = arith.constant 0 : index
    %c0_47 = arith.constant 0 : index
    %50 = vector.load %arg10[%c0_46, %c0_47] : memref<256x128xbf16, #tpu.memory_space<vmem>>, vector<256x128xbf16>
    %cst_48 = arith.constant dense<0.000000e+00> : vector<16x128xf32>
    %51 = tpu.matmul %49, %50, %cst_48 {dimension_numbers = #tpu.dot_dimension_numbers<[1], [0], [0], [1], [0, 0, 1, 1], [], []>} : vector<16x256xbf16>, vector<256x128xbf16>, vector<16x128xf32> -> vector<16x128xf32>
    %c0_49 = arith.constant 0 : index
    %c0_50 = arith.constant 0 : index
    %52 = vector.load %arg11[%c0_49, %c0_50] : memref<1x128xf32, #tpu.memory_space<vmem>>, vector<1x128xf32>
    %53 = vector.broadcast %52 : vector<1x128xf32> to vector<16x128xf32>
    %54 = arith.addf %51, %53 : vector<16x128xf32>
    %cst_51 = arith.constant dense<0xFF800000> : vector<16xf32>
    %55 = vector.multi_reduction <maximumf>, %54, %cst_51 [1] : vector<16x128xf32> to vector<16xf32>
    %56 = vector.shape_cast %55 : vector<16xf32> to vector<16x1xf32>
    %57 = vector.broadcast %56 : vector<16x1xf32> to vector<16x128xf32>
    %58 = arith.subf %54, %57 : vector<16x128xf32>
    %59 = math.exp %58 : vector<16x128xf32>
    %cst_52 = arith.constant dense<0.000000e+00> : vector<16xf32>
    %60 = vector.multi_reduction <add>, %59, %cst_52 [1] : vector<16x128xf32> to vector<16xf32>
    %61 = vector.shape_cast %60 : vector<16xf32> to vector<16x1xf32>
    %62 = vector.broadcast %61 : vector<16x1xf32> to vector<16x128xf32>
    %63 = arith.divf %59, %62 : vector<16x128xf32>
    %c0_53 = arith.constant 0 : index
    %c0_54 = arith.constant 0 : index
    %64 = vector.load %arg12[%c0_53, %c0_54] : memref<16x128xf32, #tpu.memory_space<vmem>>, vector<16x128xf32>
    tpu.vector_store %arg12[%c0_53, %c0_54], %63 {strides = array<i32>} : memref<16x128xf32, #tpu.memory_space<vmem>>, vector<16x128xf32>,
    return
  }
  func.func @transform_0(%arg0: i32, %arg1: memref<1xi32, #tpu.memory_space<smem>>) -> (i32, i32) {
    %c0_i32 = arith.constant 0 : i32
    %c0_i32_0 = arith.constant 0 : i32
    return %arg0, %c0_i32 : i32, i32
  }
  func.func @transform_1(%arg0: i32, %arg1: memref<1xi32, #tpu.memory_space<smem>>) -> (i32, i32, i32) {
    %c0_i32 = arith.constant 0 : i32
    %c0_i32_0 = arith.constant 0 : i32
    %c0_i32_1 = arith.constant 0 : i32
    return %c0_i32, %arg0, %c0_i32_0 : i32, i32, i32
  }
  func.func @transform_2(%arg0: i32, %arg1: memref<1xi32, #tpu.memory_space<smem>>) -> (i32, i32) {
    %c0_i32 = arith.constant 0 : i32
    %c0_i32_0 = arith.constant 0 : i32
    %c0_i32_1 = arith.constant 0 : i32
    return %c0_i32, %c0_i32_0 : i32, i32
  }
  func.func @transform_3(%arg0: i32, %arg1: memref<1xi32, #tpu.memory_space<smem>>) -> (i32, i32) {
    %c0_i32 = arith.constant 0 : i32
    %c0_i32_0 = arith.constant 0 : i32
    %c0_i32_1 = arith.constant 0 : i32
    return %c0_i32, %c0_i32_0 : i32, i32
  }
  func.func @transform_4(%arg0: i32, %arg1: memref<1xi32, #tpu.memory_space<smem>>) -> (i32, i32) {
    %c0_i32 = arith.constant 0 : i32
    %c0_i32_0 = arith.constant 0 : i32
    %c0_i32_1 = arith.constant 0 : i32
    return %c0_i32, %c0_i32_0 : i32, i32
  }
  func.func @transform_5(%arg0: i32, %arg1: memref<1xi32, #tpu.memory_space<smem>>) -> (i32, i32) {
    %c0_i32 = arith.constant 0 : i32
    %c0_i32_0 = arith.constant 0 : i32
    %c0_i32_1 = arith.constant 0 : i32
    return %c0_i32, %c0_i32_0 : i32, i32
  }
  func.func @transform_6(%arg0: i32, %arg1: memref<1xi32, #tpu.memory_space<smem>>) -> (i32, i32) {
    %c0_i32 = arith.constant 0 : i32
    %c0_i32_0 = arith.constant 0 : i32
    %c0_i32_1 = arith.constant 0 : i32
    return %c0_i32, %c0_i32_0 : i32, i32
  }
  func.func @transform_7(%arg0: i32, %arg1: memref<1xi32, #tpu.memory_space<smem>>) -> (i32, i32) {
    %c0_i32 = arith.constant 0 : i32
    %c0_i32_0 = arith.constant 0 : i32
    %c0_i32_1 = arith.constant 0 : i32
    return %c0_i32, %c0_i32_0 : i32, i32
  }
  func.func @transform_8(%arg0: i32, %arg1: memref<1xi32, #tpu.memory_space<smem>>) -> (i32, i32) {
    %c0_i32 = arith.constant 0 : i32
    %c0_i32_0 = arith.constant 0 : i32
    %c0_i32_1 = arith.constant 0 : i32
    return %c0_i32, %c0_i32_0 : i32, i32
  }
  func.func @transform_9(%arg0: i32, %arg1: memref<1xi32, #tpu.memory_space<smem>>) -> (i32, i32) {
    %c0_i32 = arith.constant 0 : i32
    %c0_i32_0 = arith.constant 0 : i32
    %c0_i32_1 = arith.constant 0 : i32
    return %c0_i32, %c0_i32_0 : i32, i32
  }
  func.func @transform_10(%arg0: i32, %arg1: memref<1xi32, #tpu.memory_space<smem>>) -> (i32, i32) {
    %c0_i32 = arith.constant 0 : i32
    %c0_i32_0 = arith.constant 0 : i32
    return %arg0, %c0_i32 : i32, i32
  }
}

</mosaic_0001>

<llo_original>
// kernel: tpu_custom_call.1
$region0: #{tpu_custom_call.1}
  #allocation0 [shape = 'u32[]', space=smem, size = 0x4, offset = 0x4, fixed_abs, tag = 'smem constant byte address 0x4 - core index']
  #allocation1 [shape = 'u32[144,128]{1,0:T(1,128)}', space=vmem, size = 0x12000, scoped, tag = 'internal scratch']
  #allocation2 [shape = 'f32[128,512]{1,0:T(8,128)}', space=vmem, size = 0x40000, scoped, tag = 'scratch operand']
  #allocation3 [shape = 'f32[128,512]{1,0:T(8,128)}', space=vmem, size = 0x40000, scoped, tag = 'scratch operand']
  #allocation4 [shape = 'f32[16,128]{1,0:T(8,128)}', space=vmem, size = 0x2000, scoped, tag = 'scratch operand']
  #allocation5 [shape = 'f32[16,128]{1,0:T(8,128)}', space=vmem, size = 0x2000, scoped, tag = 'scratch operand']
  #allocation6 [shape = 'f32[16,128]{1,0:T(8,128)}', space=vmem, size = 0x2000, scoped, tag = 'scratch operand']
  #allocation7 [shape = 'f32[16,128]{1,0:T(8,128)}', space=vmem, size = 0x2000, scoped, tag = 'scratch operand']
  #allocation8 [shape = 'f32[16,128]{1,0:T(8,128)}', space=vmem, size = 0x2000, scoped, tag = 'scratch operand']
  #allocation9 [shape = 'f32[16,128]{1,0:T(8,128)}', space=vmem, size = 0x2000, scoped, tag = 'scratch operand']
  #allocation10 [shape = 's32[1]{0}', space=sflag, size = 0x4, scoped, tag = 'scoped memory for tpu_custom_call.1']
  #allocation11 [shape = 's32[1]{0:T(128)S(6)}', space=smem, size = 0x200, scoped, tag = 'prefetched SMEM operand 0']
  %s0 = inlined_call_operand.<no memory space> [shape: s32[1], index: 0, kind: input, shape index: {}]
  %s1 = inlined_call_operand.vmem [shape: s32[16,1], index: 1, kind: input, shape index: {}]
  %s2 = inlined_call_operand.hbm [shape: bf16[8,16,128], index: 2, kind: input, shape index: {}]
  %s3 = inlined_call_operand.hbm [shape: bf16[128,1024], index: 3, kind: input, shape index: {}]
  %s4 = inlined_call_operand.vmem [shape: f32[1,1024], index: 4, kind: input, shape index: {}]
  %s5 = inlined_call_operand.hbm [shape: bf16[128,512], index: 5, kind: input, shape index: {}]
  %s6 = inlined_call_operand.hbm [shape: bf16[128,512], index: 6, kind: input, shape index: {}]
  %s7 = inlined_call_operand.hbm [shape: bf16[256,256], index: 7, kind: input, shape index: {}]
  %s8 = inlined_call_operand.vmem [shape: f32[1,256], index: 8, kind: input, shape index: {}]
  %s9 = inlined_call_operand.hbm [shape: bf16[256,128], index: 9, kind: input, shape index: {}]
  %s10 = inlined_call_operand.vmem [shape: f32[1,128], index: 10, kind: input, shape index: {}]
  %s11 = inlined_call_operand.hbm [shape: f32[16,128], index: 11, kind: output, shape index: {}]
  %s12 = sld [smem:[#allocation0]]
  $region81: #{tpu_custom_call.1} parent=0
    _
  %s14 = ssub.s32 1, %s12
  %s15 = scalar_select 0, %s14, %s12
  %16 = sst [smem:[#allocation11]] %s0
  $region1: #{tpu_custom_call.1} parent=0
    #allocation12 [shape = 'u8[32768]{0}', space=vmem, size = 0x8000, scoped, tag = 'input window, operand 2, single buffered']
    #allocation13 [shape = 's32[1]{0}', space=sflag, size = 0x4, scoped, tag = 'scoped memory for tpu_custom_call.1']
    #allocation14 [shape = 's32[1]{0}', space=sflag, size = 0x4, scoped, tag = 'scoped memory for tpu_custom_call.1']
    #allocation15 [shape = 'u8[262144]{0}', space=vmem, size = 0x40000, scoped, tag = 'input window, operand 3, single buffered']
    #allocation16 [shape = 's32[1]{0}', space=sflag, size = 0x4, scoped, tag = 'scoped memory for tpu_custom_call.1']
    #allocation17 [shape = 'u8[131072]{0}', space=vmem, size = 0x20000, scoped, tag = 'input window, operand 5, single buffered']
    #allocation18 [shape = 'u8[131072]{0}', space=vmem, size = 0x20000, scoped, tag = 'input window, operand 6, single buffered']
    #allocation19 [shape = 's32[1]{0}', space=sflag, size = 0x4, scoped, tag = 'scoped memory for tpu_custom_call.1']
    #allocation20 [shape = 'u8[131072]{0}', space=vmem, size = 0x20000, scoped, tag = 'input window, operand 7, single buffered']
    #allocation21 [shape = 'u8[65536]{0}', space=vmem, size = 0x10000, scoped, tag = 'input window, operand 9, single buffered']
    #allocation22 [shape = 's32[1]{0}', space=sflag, size = 0x4, scoped, tag = 'scoped memory for tpu_custom_call.1']
    #allocation23 [shape = 'u8[8192]{0}', space=vmem, size = 0x2000, scoped, tag = 'output window, operand 0, single buffered']
    %17 = vsyncpa [#allocation13], 0
    %18 = vsyncpa [#allocation16], 0
    %19 = vsyncpa [#allocation19], 0
    %20 = vsyncpa [#allocation22], 0
    %21 = vsyncpa [#allocation14], 0
    // Predicated region
    $region2: #{tpu_custom_call.1} parent=1 // pred_check
      _
    $region3: #{tpu_custom_call.1} parent=1 // pred_check_branch
      %23 = sbr.rel (0) target = $region5
    $region4: #{tpu_custom_call.1} parent=1 // pred_region
      _
    $region5: #{tpu_custom_call.1} parent=1 // pred_fallthru
      _
    // Predicated region
    $region6: #{tpu_custom_call.1} parent=1 // pred_check
      _
    $region7: #{tpu_custom_call.1} parent=1 // pred_check_branch
      %25 = sbr.rel (0) target = $region9
    $region8: #{tpu_custom_call.1} parent=1 // pred_region
      %s27 = ssub.s32 1024, 1024
      %28 = vsyncadd [#allocation13], %s27
      %s29 = sshll.u32 [#allocation12], 4
      %s30 = int_to_ptr.vmem [resolvable:$true] %s29
      %35 = dma.hbm_to_vmem [thread:$0]  %s2, 1024, %s30, [#allocation13], 64, 64, 4
    $region9: #{tpu_custom_call.1} parent=1 // pred_fallthru
      _
    // Predicated region
    $region10: #{tpu_custom_call.1} parent=1 // pred_check
      _
    $region11: #{tpu_custom_call.1} parent=1 // pred_check_branch
      %37 = sbr.rel (0) target = $region13
    $region12: #{tpu_custom_call.1} parent=1 // pred_region
      %s39 = ssub.s32 8192, 8192
      %40 = vsyncadd [#allocation16], %s39
      %s41 = sshll.u32 [#allocation15], 4
      %s42 = int_to_ptr.vmem [resolvable:$true] %s41
      %47 = dma.hbm_to_vmem [thread:$0]  %s3, 8192, %s42, [#allocation16], 512, 512, 32
    $region13: #{tpu_custom_call.1} parent=1 // pred_fallthru
      _
    // Predicated region
    $region14: #{tpu_custom_call.1} parent=1 // pred_check
      _
    $region15: #{tpu_custom_call.1} parent=1 // pred_check_branch
      %49 = sbr.rel (0) target = $region17
    $region16: #{tpu_custom_call.1} parent=1 // pred_region
      _
    $region17: #{tpu_custom_call.1} parent=1 // pred_fallthru
      _
    // Predicated region
    $region18: #{tpu_custom_call.1} parent=1 // pred_check
      _
    $region19: #{tpu_custom_call.1} parent=1 // pred_check_branch
      %51 = sbr.rel (0) target = $region21
    $region20: #{tpu_custom_call.1} parent=1 // pred_region
      %s53 = ssub.s32 4096, 4096
      %54 = vsyncadd [#allocation16], %s53
      %s55 = sshll.u32 [#allocation17], 4
      %s56 = int_to_ptr.vmem [resolvable:$true] %s55
      %61 = dma.hbm_to_vmem [thread:$0]  %s5, 4096, %s56, [#allocation16], 256, 256, 16
    $region21: #{tpu_custom_call.1} parent=1 // pred_fallthru
      _
    // Predicated region
    $region22: #{tpu_custom_call.1} parent=1 // pred_check
      _
    $region23: #{tpu_custom_call.1} parent=1 // pred_check_branch
      %63 = sbr.rel (0) target = $region25
    $region24: #{tpu_custom_call.1} parent=1 // pred_region
      %s65 = ssub.s32 4096, 4096
      %66 = vsyncadd [#allocation19], %s65
      %s67 = sshll.u32 [#allocation18], 4
      %s68 = int_to_ptr.vmem [resolvable:$true] %s67
      %73 = dma.hbm_to_vmem [thread:$0]  %s6, 4096, %s68, [#allocation19], 256, 256, 16
    $region25: #{tpu_custom_call.1} parent=1 // pred_fallthru
      _
    // Predicated region
    $region26: #{tpu_custom_call.1} parent=1 // pred_check
      _
    $region27: #{tpu_custom_call.1} parent=1 // pred_check_branch
      %75 = sbr.rel (0) target = $region29
    $region28: #{tpu_custom_call.1} parent=1 // pred_region
      %s77 = ssub.s32 4096, 4096
      %78 = vsyncadd [#allocation19], %s77
      %s79 = sshll.u32 [#allocation20], 4
      %s80 = int_to_ptr.vmem [resolvable:$true] %s79
      %85 = dma.hbm_to_vmem [thread:$0]  %s7, 4096, %s80, [#allocation19], 128, 128, 8
    $region29: #{tpu_custom_call.1} parent=1 // pred_fallthru
      _
    // Predicated region
    $region30: #{tpu_custom_call.1} parent=1 // pred_check
      _
    $region31: #{tpu_custom_call.1} parent=1 // pred_check_branch
      %87 = sbr.rel (0) target = $region33
    $region32: #{tpu_custom_call.1} parent=1 // pred_region
      _
    $region33: #{tpu_custom_call.1} parent=1 // pred_fallthru
      _
    // Predicated region
    $region34: #{tpu_custom_call.1} parent=1 // pred_check
      _
    $region35: #{tpu_custom_call.1} parent=1 // pred_check_branch
      %89 = sbr.rel (0) target = $region37
    $region36: #{tpu_custom_call.1} parent=1 // pred_region
      %s91 = ssub.s32 2048, 2048
      %92 = vsyncadd [#allocation22], %s91
      %s93 = sshll.u32 [#allocation21], 4
      %s94 = int_to_ptr.vmem [resolvable:$true] %s93
      %99 = dma.hbm_to_vmem [thread:$0]  %s9, 2048, %s94, [#allocation22], 64, 64, 4
    $region37: #{tpu_custom_call.1} parent=1 // pred_fallthru
      _
    // Predicated region
    $region38: #{tpu_custom_call.1} parent=1 // pred_check
      _
    $region39: #{tpu_custom_call.1} parent=1 // pred_check_branch
      %101 = sbr.rel (0) target = $region41
    $region40: #{tpu_custom_call.1} parent=1 // pred_region
      _
    $region41: #{tpu_custom_call.1} parent=1 // pred_fallthru
      _
    // Predicated region
    $region42: #{tpu_custom_call.1} parent=1 // pred_check
      _
    $region43: #{tpu_custom_call.1} parent=1 // pred_check_branch
      %103 = sbr.rel (0) target = $region45
    $region44: #{tpu_custom_call.1} parent=1 // pred_region
      %104 = dma.done [#allocation13], 1024
    $region45: #{tpu_custom_call.1} parent=1 // pred_fallthru
      _
    // Predicated region
    $region46: #{tpu_custom_call.1} parent=1 // pred_check
      _
    $region47: #{tpu_custom_call.1} parent=1 // pred_check_branch
      %106 = sbr.rel (0) target = $region49
    $region48: #{tpu_custom_call.1} parent=1 // pred_region
      %107 = dma.done [#allocation16], 8192
    $region49: #{tpu_custom_call.1} parent=1 // pred_fallthru
      _
    // Predicated region
    $region50: #{tpu_custom_call.1} parent=1 // pred_check
      _
    $region51: #{tpu_custom_call.1} parent=1 // pred_check_branch
      %109 = sbr.rel (0) target = $region53
    $region52: #{tpu_custom_call.1} parent=1 // pred_region
      %110 = dma.done [#allocation16], 4096
    $region53: #{tpu_custom_call.1} parent=1 // pred_fallthru
      _
    // Predicated region
    $region54: #{tpu_custom_call.1} parent=1 // pred_check
      _
    $region55: #{tpu_custom_call.1} parent=1 // pred_check_branch
      %112 = sbr.rel (0) target = $region57
    $region56: #{tpu_custom_call.1} parent=1 // pred_region
      %113 = dma.done [#allocation19], 4096
    $region57: #{tpu_custom_call.1} parent=1 // pred_fallthru
      _
    // Predicated region
    $region58: #{tpu_custom_call.1} parent=1 // pred_check
      _
    $region59: #{tpu_custom_call.1} parent=1 // pred_check_branch
      %115 = sbr.rel (0) target = $region61
    $region60: #{tpu_custom_call.1} parent=1 // pred_region
      %116 = dma.done [#allocation19], 4096
    $region61: #{tpu_custom_call.1} parent=1 // pred_fallthru
      _
    // Predicated region
    $region62: #{tpu_custom_call.1} parent=1 // pred_check
      _
    $region63: #{tpu_custom_call.1} parent=1 // pred_check_branch
      %118 = sbr.rel (0) target = $region65
    $region64: #{tpu_custom_call.1} parent=1 // pred_region
      %119 = dma.done [#allocation22], 2048
    $region65: #{tpu_custom_call.1} parent=1 // pred_fallthru
      _
    %v121 = vld [vmem:[#allocation12] sm:$0xf]
    %v122 = vld [vmem:[#allocation12 + $0x4] sm:$0xf]
    %v123 = vld [vmem:[#allocation12 + $0x8] sm:$0xf]
    %v124 = vld [vmem:[#allocation12 + $0xc] sm:$0xf]
    %v125 = vld [vmem:[#allocation12 + $0x10] sm:$0xf]
    %v126 = vld [vmem:[#allocation12 + $0x14] sm:$0xf]
    %v127 = vld [vmem:[#allocation12 + $0x18] sm:$0xf]
    %v128 = vld [vmem:[#allocation12 + $0x1c] sm:$0xf]
    %v129 = vld [vmem:[#allocation12 + $0x20] sm:$0xf]
    %v130 = vld [vmem:[#allocation12 + $0x24] sm:$0xf]
    %v131 = vld [vmem:[#allocation12 + $0x28] sm:$0xf]
    %v132 = vld [vmem:[#allocation12 + $0x2c] sm:$0xf]
    %v133 = vld [vmem:[#allocation12 + $0x30] sm:$0xf]
    %v134 = vld [vmem:[#allocation12 + $0x34] sm:$0xf]
    %v135 = vld [vmem:[#allocation12 + $0x38] sm:$0xf]
    %v136 = vld [vmem:[#allocation12 + $0x3c] sm:$0xf]
    %v137 = vld [vmem:[#allocation15] sm:$0xff]
    %v138 = vld [vmem:[#allocation15 + $0x8] sm:$0xff]
    %v139 = vld [vmem:[#allocation15 + $0x10] sm:$0xff]
    %v140 = vld [vmem:[#allocation15 + $0x18] sm:$0xff]
    %v141 = vld [vmem:[#allocation15 + $0x20] sm:$0xff]
    %v142 = vld [vmem:[#allocation15 + $0x28] sm:$0xff]
    %v143 = vld [vmem:[#allocation15 + $0x30] sm:$0xff]
    %v144 = vld [vmem:[#allocation15 + $0x38] sm:$0xff]
    %v145 = vld [vmem:[#allocation15 + $0x40] sm:$0xff]
    %v146 = vld [vmem:[#allocation15 + $0x48] sm:$0xff]
    %v147 = vld [vmem:[#allocation15 + $0x50] sm:$0xff]
    %v148 = vld [vmem:[#allocation15 + $0x58] sm:$0xff]
    %v149 = vld [vmem:[#allocation15 + $0x60] sm:$0xff]
    %v150 = vld [vmem:[#allocation15 + $0x68] sm:$0xff]
    %v151 = vld [vmem:[#allocation15 + $0x70] sm:$0xff]
    %v152 = vld [vmem:[#allocation15 + $0x78] sm:$0xff]
    %v153 = vld [vmem:[#allocation15 + $0x80] sm:$0xff]
    %v154 = vld [vmem:[#allocation15 + $0x88] sm:$0xff]
    %v155 = vld [vmem:[#allocation15 + $0x90] sm:$0xff]
    %v156 = vld [vmem:[#allocation15 + $0x98] sm:$0xff]
    %v157 = vld [vmem:[#allocation15 + $0xa0] sm:$0xff]
    %v158 = vld [vmem:[#allocation15 + $0xa8] sm:$0xff]
    %v159 = vld [vmem:[#allocation15 + $0xb0] sm:$0xff]
    %v160 = vld [vmem:[#allocation15 + $0xb8] sm:$0xff]
    %v161 = vld [vmem:[#allocation15 + $0xc0] sm:$0xff]
    %v162 = vld [vmem:[#allocation15 + $0xc8] sm:$0xff]
    %v163 = vld [vmem:[#allocation15 + $0xd0] sm:$0xff]
    %v164 = vld [vmem:[#allocation15 + $0xd8] sm:$0xff]
    %v165 = vld [vmem:[#allocation15 + $0xe0] sm:$0xff]
    %v166 = vld [vmem:[#allocation15 + $0xe8] sm:$0xff]
    %v167 = vld [vmem:[#allocation15 + $0xf0] sm:$0xff]
    %v168 = vld [vmem:[#allocation15 + $0xf8] sm:$0xff]
    %v169 = vld [vmem:[#allocation15 + $0x100] sm:$0xff]
    %v170 = vld [vmem:[#allocation15 + $0x108] sm:$0xff]
    %v171 = vld [vmem:[#allocation15 + $0x110] sm:$0xff]
    %v172 = vld [vmem:[#allocation15 + $0x118] sm:$0xff]
    %v173 = vld [vmem:[#allocation15 + $0x120] sm:$0xff]
    %v174 = vld [vmem:[#allocation15 + $0x128] sm:$0xff]
    %v175 = vld [vmem:[#allocation15 + $0x130] sm:$0xff]
    %v176 = vld [vmem:[#allocation15 + $0x138] sm:$0xff]
    %v177 = vld [vmem:[#allocation15 + $0x140] sm:$0xff]
    %v178 = vld [vmem:[#allocation15 + $0x148] sm:$0xff]
    %v179 = vld [vmem:[#allocation15 + $0x150] sm:$0xff]
    %v180 = vld [vmem:[#allocation15 + $0x158] sm:$0xff]
    %v181 = vld [vmem:[#allocation15 + $0x160] sm:$0xff]
    %v182 = vld [vmem:[#allocation15 + $0x168] sm:$0xff]
    %v183 = vld [vmem:[#allocation15 + $0x170] sm:$0xff]
    %v184 = vld [vmem:[#allocation15 + $0x178] sm:$0xff]
    %v185 = vld [vmem:[#allocation15 + $0x180] sm:$0xff]
    %v186 = vld [vmem:[#allocation15 + $0x188] sm:$0xff]
    %v187 = vld [vmem:[#allocation15 + $0x190] sm:$0xff]
    %v188 = vld [vmem:[#allocation15 + $0x198] sm:$0xff]
    %v189 = vld [vmem:[#allocation15 + $0x1a0] sm:$0xff]
    %v190 = vld [vmem:[#allocation15 + $0x1a8] sm:$0xff]
    %v191 = vld [vmem:[#allocation15 + $0x1b0] sm:$0xff]
    %v192 = vld [vmem:[#allocation15 + $0x1b8] sm:$0xff]
    %v193 = vld [vmem:[#allocation15 + $0x1c0] sm:$0xff]
    %v194 = vld [vmem:[#allocation15 + $0x1c8] sm:$0xff]
    %v195 = vld [vmem:[#allocation15 + $0x1d0] sm:$0xff]
    %v196 = vld [vmem:[#allocation15 + $0x1d8] sm:$0xff]
    %v197 = vld [vmem:[#allocation15 + $0x1e0] sm:$0xff]
    %v198 = vld [vmem:[#allocation15 + $0x1e8] sm:$0xff]
    %v199 = vld [vmem:[#allocation15 + $0x1f0] sm:$0xff]
    %v200 = vld [vmem:[#allocation15 + $0x1f8] sm:$0xff]
    %v201 = vld [vmem:[%s4] sm:$0xff]
    %v203 = vlaneseq
    %v204 = vshrl.u32 %v203, 7
    %v205 = vsub.s32 0, %v204
    %v206 = vrot.slane %v201, %v205
    %v207 = vlaneseq
    %v208 = vshrl.u32 %v207, 7
    %v209 = vsub.s32 1, %v208
    %v210 = vrot.slane %v201, %v209
    %v211 = vlaneseq
    %v212 = vshrl.u32 %v211, 7
    %v213 = vsub.s32 2, %v212
    %v214 = vrot.slane %v201, %v213
    %v215 = vlaneseq
    %v216 = vshrl.u32 %v215, 7
    %v217 = vsub.s32 3, %v216
    %v218 = vrot.slane %v201, %v217
    %v219 = vlaneseq
    %v220 = vshrl.u32 %v219, 7
    %v221 = vsub.s32 4, %v220
    %v222 = vrot.slane %v201, %v221
    %v223 = vlaneseq
    %v224 = vshrl.u32 %v223, 7
    %v225 = vsub.s32 5, %v224
    %v226 = vrot.slane %v201, %v225
    %v227 = vlaneseq
    %v228 = vshrl.u32 %v227, 7
    %v229 = vsub.s32 6, %v228
    %v230 = vrot.slane %v201, %v229
    %v231 = vlaneseq
    %v232 = vshrl.u32 %v231, 7
    %v233 = vsub.s32 7, %v232
    %v234 = vrot.slane %v201, %v233
    %v259 = vunpack.c.l.b16 %v121
    %v260 = vunpack.c.l.b16 %v122
    %v261 = vunpack.c.l.b16 %v123
    %v262 = vunpack.c.l.b16 %v124
    %v263 = vunpack.c.l.b16 %v125
    %v264 = vunpack.c.l.b16 %v126
    %v265 = vunpack.c.l.b16 %v127
    %v266 = vunpack.c.l.b16 %v128
    %v267 = vunpack.c.l.b16 %v129
    %v268 = vunpack.c.l.b16 %v130
    %v269 = vunpack.c.l.b16 %v131
    %v270 = vunpack.c.l.b16 %v132
    %v271 = vunpack.c.l.b16 %v133
    %v272 = vunpack.c.l.b16 %v134
    %v273 = vunpack.c.l.b16 %v135
    %v274 = vunpack.c.l.b16 %v136
    %v275 = vpack.c.b16 %v260, %v259
    %v276 = vpack.c.b16 %v262, %v261
    %v277 = vpack.c.b16 %v264, %v263
    %v278 = vpack.c.b16 %v266, %v265
    %v279 = vpack.c.b16 %v268, %v267
    %v280 = vpack.c.b16 %v270, %v269
    %v281 = vpack.c.b16 %v272, %v271
    %v282 = vpack.c.b16 %v274, %v273
    %v355 = vunpack.c.l.b16 %v137
    %v356 = vunpack.c.h.b16 %v137
    %v357 = vunpack.c.l.b16 %v138
    %v358 = vunpack.c.h.b16 %v138
    %v359 = vunpack.c.l.b16 %v139
    %v360 = vunpack.c.h.b16 %v139
    %v361 = vunpack.c.l.b16 %v140
    %v362 = vunpack.c.h.b16 %v140
    %v363 = vunpack.c.l.b16 %v141
    %v364 = vunpack.c.h.b16 %v141
    %v365 = vunpack.c.l.b16 %v142
    %v366 = vunpack.c.h.b16 %v142
    %v367 = vunpack.c.l.b16 %v143
    %v368 = vunpack.c.h.b16 %v143
    %v369 = vunpack.c.l.b16 %v144
    %v370 = vunpack.c.h.b16 %v144
    %v371 = vunpack.c.l.b16 %v145
    %v372 = vunpack.c.h.b16 %v145
    %v373 = vunpack.c.l.b16 %v146
    %v374 = vunpack.c.h.b16 %v146
    %v375 = vunpack.c.l.b16 %v147
    %v376 = vunpack.c.h.b16 %v147
    %v377 = vunpack.c.l.b16 %v148
    %v378 = vunpack.c.h.b16 %v148
    %v379 = vunpack.c.l.b16 %v149
    %v380 = vunpack.c.h.b16 %v149
    %v381 = vunpack.c.l.b16 %v150
    %v382 = vunpack.c.h.b16 %v150
    %v383 = vunpack.c.l.b16 %v151
    %v384 = vunpack.c.h.b16 %v151
    %v385 = vunpack.c.l.b16 %v152
    %v386 = vunpack.c.h.b16 %v152
    %v387 = vunpack.c.l.b16 %v153
    %v388 = vunpack.c.h.b16 %v153
    %v389 = vunpack.c.l.b16 %v154
    %v390 = vunpack.c.h.b16 %v154
    %v391 = vunpack.c.l.b16 %v155
    %v392 = vunpack.c.h.b16 %v155
    %v393 = vunpack.c.l.b16 %v156
    %v394 = vunpack.c.h.b16 %v156
    %v395 = vunpack.c.l.b16 %v157
    %v396 = vunpack.c.h.b16 %v157
    %v397 = vunpack.c.l.b16 %v158
    %v398 = vunpack.c.h.b16 %v158
    %v399 = vunpack.c.l.b16 %v159
    %v400 = vunpack.c.h.b16 %v159
    %v401 = vunpack.c.l.b16 %v160
    %v402 = vunpack.c.h.b16 %v160
    %v403 = vunpack.c.l.b16 %v161
    %v404 = vunpack.c.h.b16 %v161
    %v405 = vunpack.c.l.b16 %v162
    %v406 = vunpack.c.h.b16 %v162
    %v407 = vunpack.c.l.b16 %v163
    %v408 = vunpack.c.h.b16 %v163
    %v409 = vunpack.c.l.b16 %v164
    %v410 = vunpack.c.h.b16 %v164
    %v411 = vunpack.c.l.b16 %v165
    %v412 = vunpack.c.h.b16 %v165
    %v413 = vunpack.c.l.b16 %v166
    %v414 = vunpack.c.h.b16 %v166
    %v415 = vunpack.c.l.b16 %v167
    %v416 = vunpack.c.h.b16 %v167
    %v417 = vunpack.c.l.b16 %v168
    %v418 = vunpack.c.h.b16 %v168
    %v419 = vunpack.c.l.b16 %v169
    %v420 = vunpack.c.h.b16 %v169
    %v421 = vunpack.c.l.b16 %v170
    %v422 = vunpack.c.h.b16 %v170
    %v423 = vunpack.c.l.b16 %v171
    %v424 = vunpack.c.h.b16 %v171
    %v425 = vunpack.c.l.b16 %v172
    %v426 = vunpack.c.h.b16 %v172
    %v427 = vunpack.c.l.b16 %v173
    %v428 = vunpack.c.h.b16 %v173
    %v429 = vunpack.c.l.b16 %v174
    %v430 = vunpack.c.h.b16 %v174
    %v431 = vunpack.c.l.b16 %v175
    %v432 = vunpack.c.h.b16 %v175
    %v433 = vunpack.c.l.b16 %v176
    %v434 = vunpack.c.h.b16 %v176
    %v435 = vunpack.c.l.b16 %v177
    %v436 = vunpack.c.h.b16 %v177
    %v437 = vunpack.c.l.b16 %v178
    %v438 = vunpack.c.h.b16 %v178
    %v439 = vunpack.c.l.b16 %v179
    %v440 = vunpack.c.h.b16 %v179
    %v441 = vunpack.c.l.b16 %v180
    %v442 = vunpack.c.h.b16 %v180
    %v443 = vunpack.c.l.b16 %v181
    %v444 = vunpack.c.h.b16 %v181
    %v445 = vunpack.c.l.b16 %v182
    %v446 = vunpack.c.h.b16 %v182
    %v447 = vunpack.c.l.b16 %v183
    %v448 = vunpack.c.h.b16 %v183
    %v449 = vunpack.c.l.b16 %v184
    %v450 = vunpack.c.h.b16 %v184
    %v451 = vunpack.c.l.b16 %v185
    %v452 = vunpack.c.h.b16 %v185
    %v453 = vunpack.c.l.b16 %v186
    %v454 = vunpack.c.h.b16 %v186
    %v455 = vunpack.c.l.b16 %v187
    %v456 = vunpack.c.h.b16 %v187
    %v457 = vunpack.c.l.b16 %v188
    %v458 = vunpack.c.h.b16 %v188
    %v459 = vunpack.c.l.b16 %v189
    %v460 = vunpack.c.h.b16 %v189
    %v461 = vunpack.c.l.b16 %v190
    %v462 = vunpack.c.h.b16 %v190
    %v463 = vunpack.c.l.b16 %v191
    %v464 = vunpack.c.h.b16 %v191
    %v465 = vunpack.c.l.b16 %v192
    %v466 = vunpack.c.h.b16 %v192
    %v467 = vunpack.c.l.b16 %v193
    %v468 = vunpack.c.h.b16 %v193
    %v469 = vunpack.c.l.b16 %v194
    %v470 = vunpack.c.h.b16 %v194
    %v471 = vunpack.c.l.b16 %v195
    %v472 = vunpack.c.h.b16 %v195
    %v473 = vunpack.c.l.b16 %v196
    %v474 = vunpack.c.h.b16 %v196
    %v475 = vunpack.c.l.b16 %v197
    %v476 = vunpack.c.h.b16 %v197
    %v477 = vunpack.c.l.b16 %v198
    %v478 = vunpack.c.h.b16 %v198
    %v479 = vunpack.c.l.b16 %v199
    %v480 = vunpack.c.h.b16 %v199
    %v481 = vunpack.c.l.b16 %v200
    %v482 = vunpack.c.h.b16 %v200
    %v483 = vpack.c.b16 %v363, %v355
    %v484 = vpack.c.b16 %v364, %v356
    %v485 = vpack.c.b16 %v365, %v357
    %v486 = vpack.c.b16 %v366, %v358
    %v487 = vpack.c.b16 %v367, %v359
    %v488 = vpack.c.b16 %v368, %v360
    %v489 = vpack.c.b16 %v369, %v361
    %v490 = vpack.c.b16 %v370, %v362
    %v491 = vpack.c.b16 %v379, %v371
    %v492 = vpack.c.b16 %v380, %v372
    %v493 = vpack.c.b16 %v381, %v373
    %v494 = vpack.c.b16 %v382, %v374
    %v495 = vpack.c.b16 %v383, %v375
    %v496 = vpack.c.b16 %v384, %v376
    %v497 = vpack.c.b16 %v385, %v377
    %v498 = vpack.c.b16 %v386, %v378
    %v499 = vpack.c.b16 %v395, %v387
    %v500 = vpack.c.b16 %v396, %v388
    %v501 = vpack.c.b16 %v397, %v389
    %v502 = vpack.c.b16 %v398, %v390
    %v503 = vpack.c.b16 %v399, %v391
    %v504 = vpack.c.b16 %v400, %v392
    %v505 = vpack.c.b16 %v401, %v393
    %v506 = vpack.c.b16 %v402, %v394
    %v507 = vpack.c.b16 %v411, %v403
    %v508 = vpack.c.b16 %v412, %v404
    %v509 = vpack.c.b16 %v413, %v405
    %v510 = vpack.c.b16 %v414, %v406
    %v511 = vpack.c.b16 %v415, %v407
    %v512 = vpack.c.b16 %v416, %v408
    %v513 = vpack.c.b16 %v417, %v409
    %v514 = vpack.c.b16 %v418, %v410
    %v515 = vpack.c.b16 %v427, %v419
    %v516 = vpack.c.b16 %v428, %v420
    %v517 = vpack.c.b16 %v429, %v421
    %v518 = vpack.c.b16 %v430, %v422
    %v519 = vpack.c.b16 %v431, %v423
    %v520 = vpack.c.b16 %v432, %v424
    %v521 = vpack.c.b16 %v433, %v425
    %v522 = vpack.c.b16 %v434, %v426
    %v523 = vpack.c.b16 %v443, %v435
    %v524 = vpack.c.b16 %v444, %v436
    %v525 = vpack.c.b16 %v445, %v437
    %v526 = vpack.c.b16 %v446, %v438
    %v527 = vpack.c.b16 %v447, %v439
    %v528 = vpack.c.b16 %v448, %v440
    %v529 = vpack.c.b16 %v449, %v441
    %v530 = vpack.c.b16 %v450, %v442
    %v531 = vpack.c.b16 %v459, %v451
    %v532 = vpack.c.b16 %v460, %v452
    %v533 = vpack.c.b16 %v461, %v453
    %v534 = vpack.c.b16 %v462, %v454
    %v535 = vpack.c.b16 %v463, %v455
    %v536 = vpack.c.b16 %v464, %v456
    %v537 = vpack.c.b16 %v465, %v457
    %v538 = vpack.c.b16 %v466, %v458
    %v539 = vpack.c.b16 %v475, %v467
    %v540 = vpack.c.b16 %v476, %v468
    %v541 = vpack.c.b16 %v477, %v469
    %v542 = vpack.c.b16 %v478, %v470
    %v543 = vpack.c.b16 %v479, %v471
    %v544 = vpack.c.b16 %v480, %v472
    %v545 = vpack.c.b16 %v481, %v473
    %v546 = vpack.c.b16 %v482, %v474
    %611 = vmatprep.subr.bf16.mxu0 %v484
    %612 = vmatpush1.bf16.msra.mxu0 %v483
    %613 = vmatprep.subr.bf16.mxu0 %v492
    %614 = vmatpush1.bf16.msra.mxu0 %v491
    %615 = vmatprep.subr.bf16.mxu0 %v500
    %616 = vmatpush1.bf16.msra.mxu0 %v499
    %617 = vmatprep.subr.bf16.mxu0 %v508
    %618 = vmatpush1.bf16.msra.mxu0 %v507
    %619 = vmatprep.subr.bf16.mxu0 %v516
    %620 = vmatpush1.bf16.msra.mxu0 %v515
    %621 = vmatprep.subr.bf16.mxu0 %v524
    %622 = vmatpush1.bf16.msra.mxu0 %v523
    %623 = vmatprep.subr.bf16.mxu0 %v532
    %624 = vmatpush1.bf16.msra.mxu0 %v531
    %625 = vmatprep.subr.bf16.mxu0 %v540
    %626 = vmatpush1.bf16.msra.mxu0 %v539
    %627 = vmatprep.subr.bf16.mxu0 0
    %628 = vmatpush1.bf16.msra.mxu0 0
    %629 = vmatprep.subr.bf16.mxu0 0
    %630 = vmatpush1.bf16.msra.mxu0 0
    %631 = vmatprep.subr.bf16.mxu0 0
    %632 = vmatpush1.bf16.msra.mxu0 0
    %633 = vmatprep.subr.bf16.mxu0 0
    %634 = vmatpush1.bf16.msra.mxu0 0
    %635 = vmatprep.subr.bf16.mxu0 0
    %636 = vmatpush1.bf16.msra.mxu0 0
    %637 = vmatprep.subr.bf16.mxu0 0
    %638 = vmatpush1.bf16.msra.mxu0 0
    %639 = vmatprep.subr.bf16.mxu0 0
    %640 = vmatpush1.bf16.msra.mxu0 0
    %641 = vmatprep.subr.bf16.mxu0 0
    %642 = vmatpush1.bf16.msra.mxu0 0
    %643 = vmatprep.mubr.bf16.mxu0 0
    %644 = vmatmul.mubr.bf16.gmra.mrb[0].mxu0 %v275
    %v645 = vpop.f32.mrb[0].mxu0
    %v646 = vadd.f32 %v206, %v645
    %v647 = vpop.f32.mrb[0].mxu0
    %v648 = vadd.f32 %v210, %v647
    %v649 = vpop.f32.mrb[0].mxu0
    %v650 = vadd.f32 %v206, %v649
    %v651 = vpop.f32.mrb[0].mxu0
    %v652 = vadd.f32 %v210, %v651
    %653 = vmatprep.mubr.bf16.mxu0 0
    %654 = vmatmul.mubr.bf16.gmra.mrb[0].mxu0 %v276
    %v655 = vpop.f32.mrb[0].mxu0
    %v656 = vadd.f32 %v206, %v655
    %v657 = vpop.f32.mrb[0].mxu0
    %v658 = vadd.f32 %v210, %v657
    %v659 = vpop.f32.mrb[0].mxu0
    %v660 = vadd.f32 %v206, %v659
    %v661 = vpop.f32.mrb[0].mxu0
    %v662 = vadd.f32 %v210, %v661
    %663 = vmatprep.mubr.bf16.mxu0 0
    %664 = vmatmul.mubr.bf16.gmra.mrb[0].mxu0 %v277
    %v665 = vpop.f32.mrb[0].mxu0
    %v666 = vadd.f32 %v206, %v665
    %v667 = vpop.f32.mrb[0].mxu0
    %v668 = vadd.f32 %v210, %v667
    %v669 = vpop.f32.mrb[0].mxu0
    %v670 = vadd.f32 %v206, %v669
    %v671 = vpop.f32.mrb[0].mxu0
    %v672 = vadd.f32 %v210, %v671
    %673 = vmatprep.mubr.bf16.mxu0 0
    %674 = vmatmul.mubr.bf16.gmra.mrb[0].mxu0 %v278
    %v675 = vpop.f32.mrb[0].mxu0
    %v676 = vadd.f32 %v206, %v675
    %v677 = vpop.f32.mrb[0].mxu0
    %v678 = vadd.f32 %v210, %v677
    %v679 = vpop.f32.mrb[0].mxu0
    %v680 = vadd.f32 %v206, %v679
    %v681 = vpop.f32.mrb[0].mxu0
    %v682 = vadd.f32 %v210, %v681
    %683 = vmatprep.mubr.bf16.mxu0 0
    %684 = vmatmul.mubr.bf16.gmra.mrb[0].mxu0 %v279
    %v685 = vpop.f32.mrb[0].mxu0
    %v686 = vadd.f32 %v206, %v685
    %v687 = vpop.f32.mrb[0].mxu0
    %v688 = vadd.f32 %v210, %v687
    %v689 = vpop.f32.mrb[0].mxu0
    %v690 = vadd.f32 %v206, %v689
    %v691 = vpop.f32.mrb[0].mxu0
    %v692 = vadd.f32 %v210, %v691
    %693 = vmatprep.mubr.bf16.mxu0 0
    %694 = vmatmul.mubr.bf16.gmra.mrb[0].mxu0 %v280
    %v695 = vpop.f32.mrb[0].mxu0
    %v696 = vadd.f32 %v206, %v695
    %v697 = vpop.f32.mrb[0].mxu0
    %v698 = vadd.f32 %v210, %v697
    %v699 = vpop.f32.mrb[0].mxu0
    %v700 = vadd.f32 %v206, %v699
    %v701 = vpop.f32.mrb[0].mxu0
    %v702 = vadd.f32 %v210, %v701
    %703 = vmatprep.mubr.bf16.mxu0 0
    %704 = vmatmul.mubr.bf16.gmra.mrb[0].mxu0 %v281
    %v705 = vpop.f32.mrb[0].mxu0
    %v706 = vadd.f32 %v206, %v705
    %v707 = vpop.f32.mrb[0].mxu0
    %v708 = vadd.f32 %v210, %v707
    %v709 = vpop.f32.mrb[0].mxu0
    %v710 = vadd.f32 %v206, %v709
    %v711 = vpop.f32.mrb[0].mxu0
    %v712 = vadd.f32 %v210, %v711
    %713 = vmatprep.mubr.bf16.mxu0 0
    %714 = vmatmul.mubr.bf16.gmra.mrb[0].mxu0 %v282
    %v715 = vpop.f32.mrb[0].mxu0
    %v716 = vadd.f32 %v206, %v715
    %v717 = vpop.f32.mrb[0].mxu0
    %v718 = vadd.f32 %v210, %v717
    %v719 = vpop.f32.mrb[0].mxu0
    %v720 = vadd.f32 %v206, %v719
    %v721 = vpop.f32.mrb[0].mxu0
    %v722 = vadd.f32 %v210, %v721
    %723 = vdwg.mxu0
    %724 = vmatprep.subr.bf16.mxu0 %v486
    %725 = vmatpush1.bf16.msra.mxu0 %v485
    %726 = vmatprep.subr.bf16.mxu0 %v494
    %727 = vmatpush1.bf16.msra.mxu0 %v493
    %728 = vmatprep.subr.bf16.mxu0 %v502
    %729 = vmatpush1.bf16.msra.mxu0 %v501
    %730 = vmatprep.subr.bf16.mxu0 %v510
    %731 = vmatpush1.bf16.msra.mxu0 %v509
    %732 = vmatprep.subr.bf16.mxu0 %v518
    %733 = vmatpush1.bf16.msra.mxu0 %v517
    %734 = vmatprep.subr.bf16.mxu0 %v526
    %735 = vmatpush1.bf16.msra.mxu0 %v525
    %736 = vmatprep.subr.bf16.mxu0 %v534
    %737 = vmatpush1.bf16.msra.mxu0 %v533
    %738 = vmatprep.subr.bf16.mxu0 %v542
    %739 = vmatpush1.bf16.msra.mxu0 %v541
    %740 = vmatprep.subr.bf16.mxu0 0
    %741 = vmatpush1.bf16.msra.mxu0 0
    %742 = vmatprep.subr.bf16.mxu0 0
    %743 = vmatpush1.bf16.msra.mxu0 0
    %744 = vmatprep.subr.bf16.mxu0 0
    %745 = vmatpush1.bf16.msra.mxu0 0
    %746 = vmatprep.subr.bf16.mxu0 0
    %747 = vmatpush1.bf16.msra.mxu0 0
    %748 = vmatprep.subr.bf16.mxu0 0
    %749 = vmatpush1.bf16.msra.mxu0 0
    %750 = vmatprep.subr.bf16.mxu0 0
    %751 = vmatpush1.bf16.msra.mxu0 0
    %752 = vmatprep.subr.bf16.mxu0 0
    %753 = vmatpush1.bf16.msra.mxu0 0
    %754 = vmatprep.subr.bf16.mxu0 0
    %755 = vmatpush1.bf16.msra.mxu0 0
    %756 = vmatprep.mubr.bf16.mxu0 0
    %757 = vmatmul.mubr.bf16.gmra.mrb[0].mxu0 %v275
    %v758 = vpop.f32.mrb[0].mxu0
    %v759 = vadd.f32 %v214, %v758
    %v760 = vpop.f32.mrb[0].mxu0
    %v761 = vadd.f32 %v218, %v760
    %v762 = vpop.f32.mrb[0].mxu0
    %v763 = vadd.f32 %v214, %v762
    %v764 = vpop.f32.mrb[0].mxu0
    %v765 = vadd.f32 %v218, %v764
    %766 = vmatprep.mubr.bf16.mxu0 0
    %767 = vmatmul.mubr.bf16.gmra.mrb[0].mxu0 %v276
    %v768 = vpop.f32.mrb[0].mxu0
    %v769 = vadd.f32 %v214, %v768
    %v770 = vpop.f32.mrb[0].mxu0
    %v771 = vadd.f32 %v218, %v770
    %v772 = vpop.f32.mrb[0].mxu0
    %v773 = vadd.f32 %v214, %v772
    %v774 = vpop.f32.mrb[0].mxu0
    %v775 = vadd.f32 %v218, %v774
    %776 = vmatprep.mubr.bf16.mxu0 0
    %777 = vmatmul.mubr.bf16.gmra.mrb[0].mxu0 %v277
    %v778 = vpop.f32.mrb[0].mxu0
    %v779 = vadd.f32 %v214, %v778
    %v780 = vpop.f32.mrb[0].mxu0
    %v781 = vadd.f32 %v218, %v780
    %v782 = vpop.f32.mrb[0].mxu0
    %v783 = vadd.f32 %v214, %v782
    %v784 = vpop.f32.mrb[0].mxu0
    %v785 = vadd.f32 %v218, %v784
    %786 = vmatprep.mubr.bf16.mxu0 0
    %787 = vmatmul.mubr.bf16.gmra.mrb[0].mxu0 %v278
    %v788 = vpop.f32.mrb[0].mxu0
    %v789 = vadd.f32 %v214, %v788
    %v790 = vpop.f32.mrb[0].mxu0
    %v791 = vadd.f32 %v218, %v790
    %v792 = vpop.f32.mrb[0].mxu0
    %v793 = vadd.f32 %v214, %v792
    %v794 = vpop.f32.mrb[0].mxu0
    %v795 = vadd.f32 %v218, %v794
    %796 = vmatprep.mubr.bf16.mxu0 0
    %797 = vmatmul.mubr.bf16.gmra.mrb[0].mxu0 %v279
    %v798 = vpop.f32.mrb[0].mxu0
    %v799 = vadd.f32 %v214, %v798
    %v800 = vpop.f32.mrb[0].mxu0
    %v801 = vadd.f32 %v218, %v800
    %v802 = vpop.f32.mrb[0].mxu0
    %v803 = vadd.f32 %v214, %v802
    %v804 = vpop.f32.mrb[0].mxu0
    %v805 = vadd.f32 %v218, %v804
    %806 = vmatprep.mubr.bf16.mxu0 0
    %807 = vmatmul.mubr.bf16.gmra.mrb[0].mxu0 %v280
    %v808 = vpop.f32.mrb[0].mxu0
    %v809 = vadd.f32 %v214, %v808
    %v810 = vpop.f32.mrb[0].mxu0
    %v811 = vadd.f32 %v218, %v810
    %v812 = vpop.f32.mrb[0].mxu0
    %v813 = vadd.f32 %v214, %v812
    %v814 = vpop.f32.mrb[0].mxu0
    %v815 = vadd.f32 %v218, %v814
    %816 = vmatprep.mubr.bf16.mxu0 0
    %817 = vmatmul.mubr.bf16.gmra.mrb[0].mxu0 %v281
    %v818 = vpop.f32.mrb[0].mxu0
    %v819 = vadd.f32 %v214, %v818
    %v820 = vpop.f32.mrb[0].mxu0
    %v821 = vadd.f32 %v218, %v820
    %v822 = vpop.f32.mrb[0].mxu0
    %v823 = vadd.f32 %v214, %v822
    %v824 = vpop.f32.mrb[0].mxu0
    %v825 = vadd.f32 %v218, %v824
    %826 = vmatprep.mubr.bf16.mxu0 0
    %827 = vmatmul.mubr.bf16.gmra.mrb[0].mxu0 %v282
    %v828 = vpop.f32.mrb[0].mxu0
    %v829 = vadd.f32 %v214, %v828
    %v830 = vpop.f32.mrb[0].mxu0
    %v831 = vadd.f32 %v218, %v830
    %v832 = vpop.f32.mrb[0].mxu0
    %v833 = vadd.f32 %v214, %v832
    %v834 = vpop.f32.mrb[0].mxu0
    %v835 = vadd.f32 %v218, %v834
    %836 = vdwg.mxu0
    %837 = vmatprep.subr.bf16.mxu0 %v488
    %838 = vmatpush1.bf16.msra.mxu0 %v487
    %839 = vmatprep.subr.bf16.mxu0 %v496
    %840 = vmatpush1.bf16.msra.mxu0 %v495
    %841 = vmatprep.subr.bf16.mxu0 %v504
    %842 = vmatpush1.bf16.msra.mxu0 %v503
    %843 = vmatprep.subr.bf16.mxu0 %v512
    %844 = vmatpush1.bf16.msra.mxu0 %v511
    %845 = vmatprep.subr.bf16.mxu0 %v520
    %846 = vmatpush1.bf16.msra.mxu0 %v519
    %847 = vmatprep.subr.bf16.mxu0 %v528
    %848 = vmatpush1.bf16.msra.mxu0 %v527
    %849 = vmatprep.subr.bf16.mxu0 %v536
    %850 = vmatpush1.bf16.msra.mxu0 %v535
    %851 = vmatprep.subr.bf16.mxu0 %v544
    %852 = vmatpush1.bf16.msra.mxu0 %v543
    %853 = vmatprep.subr.bf16.mxu0 0
    %854 = vmatpush1.bf16.msra.mxu0 0
    %855 = vmatprep.subr.bf16.mxu0 0
    %856 = vmatpush1.bf16.msra.mxu0 0
    %857 = vmatprep.subr.bf16.mxu0 0
    %858 = vmatpush1.bf16.msra.mxu0 0
    %859 = vmatprep.subr.bf16.mxu0 0
    %860 = vmatpush1.bf16.msra.mxu0 0
    %861 = vmatprep.subr.bf16.mxu0 0
    %862 = vmatpush1.bf16.msra.mxu0 0
    %863 = vmatprep.subr.bf16.mxu0 0
    %864 = vmatpush1.bf16.msra.mxu0 0
    %865 = vmatprep.subr.bf16.mxu0 0
    %866 = vmatpush1.bf16.msra.mxu0 0
    %867 = vmatprep.subr.bf16.mxu0 0
    %868 = vmatpush1.bf16.msra.mxu0 0
    %869 = vmatprep.mubr.bf16.mxu0 0
    %870 = vmatmul.mubr.bf16.gmra.mrb[0].mxu0 %v275
    %v871 = vpop.f32.mrb[0].mxu0
    %v872 = vadd.f32 %v222, %v871
    %v873 = vpop.f32.mrb[0].mxu0
    %v874 = vadd.f32 %v226, %v873
    %v875 = vpop.f32.mrb[0].mxu0
    %v876 = vadd.f32 %v222, %v875
    %v877 = vpop.f32.mrb[0].mxu0
    %v878 = vadd.f32 %v226, %v877
    %879 = vmatprep.mubr.bf16.mxu0 0
    %880 = vmatmul.mubr.bf16.gmra.mrb[0].mxu0 %v276
    %v881 = vpop.f32.mrb[0].mxu0
    %v882 = vadd.f32 %v222, %v881
    %v883 = vpop.f32.mrb[0].mxu0
    %v884 = vadd.f32 %v226, %v883
    %v885 = vpop.f32.mrb[0].mxu0
    %v886 = vadd.f32 %v222, %v885
    %v887 = vpop.f32.mrb[0].mxu0
    %v888 = vadd.f32 %v226, %v887
    %889 = vmatprep.mubr.bf16.mxu0 0
    %890 = vmatmul.mubr.bf16.gmra.mrb[0].mxu0 %v277
    %v891 = vpop.f32.mrb[0].mxu0
    %v892 = vadd.f32 %v222, %v891
    %v893 = vpop.f32.mrb[0].mxu0
    %v894 = vadd.f32 %v226, %v893
    %v895 = vpop.f32.mrb[0].mxu0
    %v896 = vadd.f32 %v222, %v895
    %v897 = vpop.f32.mrb[0].mxu0
    %v898 = vadd.f32 %v226, %v897
    %899 = vmatprep.mubr.bf16.mxu0 0
    %900 = vmatmul.mubr.bf16.gmra.mrb[0].mxu0 %v278
    %v901 = vpop.f32.mrb[0].mxu0
    %v902 = vadd.f32 %v222, %v901
    %v903 = vpop.f32.mrb[0].mxu0
    %v904 = vadd.f32 %v226, %v903
    %v905 = vpop.f32.mrb[0].mxu0
    %v906 = vadd.f32 %v222, %v905
    %v907 = vpop.f32.mrb[0].mxu0
    %v908 = vadd.f32 %v226, %v907
    %909 = vmatprep.mubr.bf16.mxu0 0
    %910 = vmatmul.mubr.bf16.gmra.mrb[0].mxu0 %v279
    %v911 = vpop.f32.mrb[0].mxu0
    %v912 = vadd.f32 %v222, %v911
    %v913 = vpop.f32.mrb[0].mxu0
    %v914 = vadd.f32 %v226, %v913
    %v915 = vpop.f32.mrb[0].mxu0
    %v916 = vadd.f32 %v222, %v915
    %v917 = vpop.f32.mrb[0].mxu0
    %v918 = vadd.f32 %v226, %v917
    %919 = vmatprep.mubr.bf16.mxu0 0
    %920 = vmatmul.mubr.bf16.gmra.mrb[0].mxu0 %v280
    %v921 = vpop.f32.mrb[0].mxu0
    %v922 = vadd.f32 %v222, %v921
    %v923 = vpop.f32.mrb[0].mxu0
    %v924 = vadd.f32 %v226, %v923
    %v925 = vpop.f32.mrb[0].mxu0
    %v926 = vadd.f32 %v222, %v925
    %v927 = vpop.f32.mrb[0].mxu0
    %v928 = vadd.f32 %v226, %v927
    %929 = vmatprep.mubr.bf16.mxu0 0
    %930 = vmatmul.mubr.bf16.gmra.mrb[0].mxu0 %v281
    %v931 = vpop.f32.mrb[0].mxu0
    %v932 = vadd.f32 %v222, %v931
    %v933 = vpop.f32.mrb[0].mxu0
    %v934 = vadd.f32 %v226, %v933
    %v935 = vpop.f32.mrb[0].mxu0
    %v936 = vadd.f32 %v222, %v935
    %v937 = vpop.f32.mrb[0].mxu0
    %v938 = vadd.f32 %v226, %v937
    %939 = vmatprep.mubr.bf16.mxu0 0
    %940 = vmatmul.mubr.bf16.gmra.mrb[0].mxu0 %v282
    %v941 = vpop.f32.mrb[0].mxu0
    %v942 = vadd.f32 %v222, %v941
    %v943 = vpop.f32.mrb[0].mxu0
    %v944 = vadd.f32 %v226, %v943
    %v945 = vpop.f32.mrb[0].mxu0
    %v946 = vadd.f32 %v222, %v945
    %v947 = vpop.f32.mrb[0].mxu0
    %v948 = vadd.f32 %v226, %v947
    %949 = vdwg.mxu0
    %950 = vmatprep.subr.bf16.mxu0 %v490
    %951 = vmatpush1.bf16.msra.mxu0 %v489
    %952 = vmatprep.subr.bf16.mxu0 %v498
    %953 = vmatpush1.bf16.msra.mxu0 %v497
    %954 = vmatprep.subr.bf16.mxu0 %v506
    %955 = vmatpush1.bf16.msra.mxu0 %v505
    %956 = vmatprep.subr.bf16.mxu0 %v514
    %957 = vmatpush1.bf16.msra.mxu0 %v513
    %958 = vmatprep.subr.bf16.mxu0 %v522
    %959 = vmatpush1.bf16.msra.mxu0 %v521
    %960 = vmatprep.subr.bf16.mxu0 %v530
    %961 = vmatpush1.bf16.msra.mxu0 %v529
    %962 = vmatprep.subr.bf16.mxu0 %v538
    %963 = vmatpush1.bf16.msra.mxu0 %v537
    %964 = vmatprep.subr.bf16.mxu0 %v546
    %965 = vmatpush1.bf16.msra.mxu0 %v545
    %966 = vmatprep.subr.bf16.mxu0 0
    %967 = vmatpush1.bf16.msra.mxu0 0
    %968 = vmatprep.subr.bf16.mxu0 0
    %969 = vmatpush1.bf16.msra.mxu0 0
    %970 = vmatprep.subr.bf16.mxu0 0
    %971 = vmatpush1.bf16.msra.mxu0 0
    %972 = vmatprep.subr.bf16.mxu0 0
    %973 = vmatpush1.bf16.msra.mxu0 0
    %974 = vmatprep.subr.bf16.mxu0 0
    %975 = vmatpush1.bf16.msra.mxu0 0
    %976 = vmatprep.subr.bf16.mxu0 0
    %977 = vmatpush1.bf16.msra.mxu0 0
    %978 = vmatprep.subr.bf16.mxu0 0
    %979 = vmatpush1.bf16.msra.mxu0 0
    %980 = vmatprep.subr.bf16.mxu0 0
    %981 = vmatpush1.bf16.msra.mxu0 0
    %982 = vmatprep.mubr.bf16.mxu0 0
    %983 = vmatmul.mubr.bf16.gmra.mrb[0].mxu0 %v275
    %v984 = vpop.f32.mrb[0].mxu0
    %v985 = vadd.f32 %v230, %v984
    %v986 = vpop.f32.mrb[0].mxu0
    %v987 = vadd.f32 %v234, %v986
    %v988 = vpop.f32.mrb[0].mxu0
    %v989 = vadd.f32 %v230, %v988
    %v990 = vpop.f32.mrb[0].mxu0
    %v991 = vadd.f32 %v234, %v990
    %992 = vmatprep.mubr.bf16.mxu0 0
    %993 = vmatmul.mubr.bf16.gmra.mrb[0].mxu0 %v276
    %v994 = vpop.f32.mrb[0].mxu0
    %v995 = vadd.f32 %v230, %v994
    %v996 = vpop.f32.mrb[0].mxu0
    %v997 = vadd.f32 %v234, %v996
    %v998 = vpop.f32.mrb[0].mxu0
    %v999 = vadd.f32 %v230, %v998
    %v1000 = vpop.f32.mrb[0].mxu0
    %v1001 = vadd.f32 %v234, %v1000
    %1002 = vmatprep.mubr.bf16.mxu0 0
    %1003 = vmatmul.mubr.bf16.gmra.mrb[0].mxu0 %v277
    %v1004 = vpop.f32.mrb[0].mxu0
    %v1005 = vadd.f32 %v230, %v1004
    %v1006 = vpop.f32.mrb[0].mxu0
    %v1007 = vadd.f32 %v234, %v1006
    %v1008 = vpop.f32.mrb[0].mxu0
    %v1009 = vadd.f32 %v230, %v1008
    %v1010 = vpop.f32.mrb[0].mxu0
    %v1011 = vadd.f32 %v234, %v1010
    %1012 = vmatprep.mubr.bf16.mxu0 0
    %1013 = vmatmul.mubr.bf16.gmra.mrb[0].mxu0 %v278
    %v1014 = vpop.f32.mrb[0].mxu0
    %v1015 = vadd.f32 %v230, %v1014
    %v1016 = vpop.f32.mrb[0].mxu0
    %v1017 = vadd.f32 %v234, %v1016
    %v1018 = vpop.f32.mrb[0].mxu0
    %v1019 = vadd.f32 %v230, %v1018
    %v1020 = vpop.f32.mrb[0].mxu0
    %v1021 = vadd.f32 %v234, %v1020
    %1022 = vmatprep.mubr.bf16.mxu0 0
    %1023 = vmatmul.mubr.bf16.gmra.mrb[0].mxu0 %v279
    %v1024 = vpop.f32.mrb[0].mxu0
    %v1025 = vadd.f32 %v230, %v1024
    %v1026 = vpop.f32.mrb[0].mxu0
    %v1027 = vadd.f32 %v234, %v1026
    %v1028 = vpop.f32.mrb[0].mxu0
    %v1029 = vadd.f32 %v230, %v1028
    %v1030 = vpop.f32.mrb[0].mxu0
    %v1031 = vadd.f32 %v234, %v1030
    %1032 = vmatprep.mubr.bf16.mxu0 0
    %1033 = vmatmul.mubr.bf16.gmra.mrb[0].mxu0 %v280
    %v1034 = vpop.f32.mrb[0].mxu0
    %v1035 = vadd.f32 %v230, %v1034
    %v1036 = vpop.f32.mrb[0].mxu0
    %v1037 = vadd.f32 %v234, %v1036
    %v1038 = vpop.f32.mrb[0].mxu0
    %v1039 = vadd.f32 %v230, %v1038
    %v1040 = vpop.f32.mrb[0].mxu0
    %v1041 = vadd.f32 %v234, %v1040
    %1042 = vmatprep.mubr.bf16.mxu0 0
    %1043 = vmatmul.mubr.bf16.gmra.mrb[0].mxu0 %v281
    %v1044 = vpop.f32.mrb[0].mxu0
    %v1045 = vadd.f32 %v230, %v1044
    %v1046 = vpop.f32.mrb[0].mxu0
    %v1047 = vadd.f32 %v234, %v1046
    %v1048 = vpop.f32.mrb[0].mxu0
    %v1049 = vadd.f32 %v230, %v1048
    %v1050 = vpop.f32.mrb[0].mxu0
    %v1051 = vadd.f32 %v234, %v1050
    %1052 = vmatprep.mubr.bf16.mxu0 0
    %1053 = vmatmul.mubr.bf16.gmra.mrb[0].mxu0 %v282
    %v1054 = vpop.f32.mrb[0].mxu0
    %v1055 = vadd.f32 %v230, %v1054
    %v1056 = vpop.f32.mrb[0].mxu0
    %v1057 = vadd.f32 %v234, %v1056
    %v1058 = vpop.f32.mrb[0].mxu0
    %v1059 = vadd.f32 %v230, %v1058
    %v1060 = vpop.f32.mrb[0].mxu0
    %v1061 = vadd.f32 %v234, %v1060
    %1062 = vdwg.mxu0
    %1063 = vst [vmem:[#allocation2] sm:$0xff] %v646
    %1064 = vst [vmem:[#allocation2 + $0x8] sm:$0xff] %v648
    %1065 = vst [vmem:[#allocation2 + $0x10] sm:$0xff] %v759
    %1066 = vst [vmem:[#allocation2 + $0x18] sm:$0xff] %v761
    %1067 = vst [vmem:[#allocation2 + $0x20] sm:$0xff] %v650
    %1068 = vst [vmem:[#allocation2 + $0x28] sm:$0xff] %v652
    %1069 = vst [vmem:[#allocation2 + $0x30] sm:$0xff] %v763
    %1070 = vst [vmem:[#allocation2 + $0x38] sm:$0xff] %v765
    %1071 = vst [vmem:[#allocation2 + $0x40] sm:$0xff] %v656
    %1072 = vst [vmem:[#allocation2 + $0x48] sm:$0xff] %v658
    %1073 = vst [vmem:[#allocation2 + $0x50] sm:$0xff] %v769
    %1074 = vst [vmem:[#allocation2 + $0x58] sm:$0xff] %v771
    %1075 = vst [vmem:[#allocation2 + $0x60] sm:$0xff] %v660
    %1076 = vst [vmem:[#allocation2 + $0x68] sm:$0xff] %v662
    %1077 = vst [vmem:[#allocation2 + $0x70] sm:$0xff] %v773
    %1078 = vst [vmem:[#allocation2 + $0x78] sm:$0xff] %v775
    %1079 = vst [vmem:[#allocation2 + $0x80] sm:$0xff] %v666
    %1080 = vst [vmem:[#allocation2 + $0x88] sm:$0xff] %v668
    %1081 = vst [vmem:[#allocation2 + $0x90] sm:$0xff] %v779
    %1082 = vst [vmem:[#allocation2 + $0x98] sm:$0xff] %v781
    %1083 = vst [vmem:[#allocation2 + $0xa0] sm:$0xff] %v670
    %1084 = vst [vmem:[#allocation2 + $0xa8] sm:$0xff] %v672
    %1085 = vst [vmem:[#allocation2 + $0xb0] sm:$0xff] %v783
    %1086 = vst [vmem:[#allocation2 + $0xb8] sm:$0xff] %v785
    %1087 = vst [vmem:[#allocation2 + $0xc0] sm:$0xff] %v676
    %1088 = vst [vmem:[#allocation2 + $0xc8] sm:$0xff] %v678
    %1089 = vst [vmem:[#allocation2 + $0xd0] sm:$0xff] %v789
    %1090 = vst [vmem:[#allocation2 + $0xd8] sm:$0xff] %v791
    %1091 = vst [vmem:[#allocation2 + $0xe0] sm:$0xff] %v680
    %1092 = vst [vmem:[#allocation2 + $0xe8] sm:$0xff] %v682
    %1093 = vst [vmem:[#allocation2 + $0xf0] sm:$0xff] %v793
    %1094 = vst [vmem:[#allocation2 + $0xf8] sm:$0xff] %v795
    %1095 = vst [vmem:[#allocation2 + $0x100] sm:$0xff] %v686
    %1096 = vst [vmem:[#allocation2 + $0x108] sm:$0xff] %v688
    %1097 = vst [vmem:[#allocation2 + $0x110] sm:$0xff] %v799
    %1098 = vst [vmem:[#allocation2 + $0x118] sm:$0xff] %v801
    %1099 = vst [vmem:[#allocation2 + $0x120] sm:$0xff] %v690
    %1100 = vst [vmem:[#allocation2 + $0x128] sm:$0xff] %v692
    %1101 = vst [vmem:[#allocation2 + $0x130] sm:$0xff] %v803
    %1102 = vst [vmem:[#allocation2 + $0x138] sm:$0xff] %v805
    %1103 = vst [vmem:[#allocation2 + $0x140] sm:$0xff] %v696
    %1104 = vst [vmem:[#allocation2 + $0x148] sm:$0xff] %v698
    %1105 = vst [vmem:[#allocation2 + $0x150] sm:$0xff] %v809
    %1106 = vst [vmem:[#allocation2 + $0x158] sm:$0xff] %v811
    %1107 = vst [vmem:[#allocation2 + $0x160] sm:$0xff] %v700
    %1108 = vst [vmem:[#allocation2 + $0x168] sm:$0xff] %v702
    %1109 = vst [vmem:[#allocation2 + $0x170] sm:$0xff] %v813
    %1110 = vst [vmem:[#allocation2 + $0x178] sm:$0xff] %v815
    %1111 = vst [vmem:[#allocation2 + $0x180] sm:$0xff] %v706
    %1112 = vst [vmem:[#allocation2 + $0x188] sm:$0xff] %v708
    %1113 = vst [vmem:[#allocation2 + $0x190] sm:$0xff] %v819
    %1114 = vst [vmem:[#allocation2 + $0x198] sm:$0xff] %v821
    %1115 = vst [vmem:[#allocation2 + $0x1a0] sm:$0xff] %v710
    %1116 = vst [vmem:[#allocation2 + $0x1a8] sm:$0xff] %v712
    %1117 = vst [vmem:[#allocation2 + $0x1b0] sm:$0xff] %v823
    %1118 = vst [vmem:[#allocation2 + $0x1b8] sm:$0xff] %v825
    %1119 = vst [vmem:[#allocation2 + $0x1c0] sm:$0xff] %v716
    %1120 = vst [vmem:[#allocation2 + $0x1c8] sm:$0xff] %v718
    %1121 = vst [vmem:[#allocation2 + $0x1d0] sm:$0xff] %v829
    %1122 = vst [vmem:[#allocation2 + $0x1d8] sm:$0xff] %v831
    %1123 = vst [vmem:[#allocation2 + $0x1e0] sm:$0xff] %v720
    %1124 = vst [vmem:[#allocation2 + $0x1e8] sm:$0xff] %v722
    %1125 = vst [vmem:[#allocation2 + $0x1f0] sm:$0xff] %v833
    %1126 = vst [vmem:[#allocation2 + $0x1f8] sm:$0xff] %v835
    %1127 = vst [vmem:[#allocation3] sm:$0xff] %v872
    %1128 = vst [vmem:[#allocation3 + $0x8] sm:$0xff] %v874
    %1129 = vst [vmem:[#allocation3 + $0x10] sm:$0xff] %v985
    %1130 = vst [vmem:[#allocation3 + $0x18] sm:$0xff] %v987
    %1131 = vst [vmem:[#allocation3 + $0x20] sm:$0xff] %v876
    %1132 = vst [vmem:[#allocation3 + $0x28] sm:$0xff] %v878
    %1133 = vst [vmem:[#allocation3 + $0x30] sm:$0xff] %v989
    %1134 = vst [vmem:[#allocation3 + $0x38] sm:$0xff] %v991
    %1135 = vst [vmem:[#allocation3 + $0x40] sm:$0xff] %v882
    %1136 = vst [vmem:[#allocation3 + $0x48] sm:$0xff] %v884
    %1137 = vst [vmem:[#allocation3 + $0x50] sm:$0xff] %v995
    %1138 = vst [vmem:[#allocation3 + $0x58] sm:$0xff] %v997
    %1139 = vst [vmem:[#allocation3 + $0x60] sm:$0xff] %v886
    %1140 = vst [vmem:[#allocation3 + $0x68] sm:$0xff] %v888
    %1141 = vst [vmem:[#allocation3 + $0x70] sm:$0xff] %v999
    %1142 = vst [vmem:[#allocation3 + $0x78] sm:$0xff] %v1001
    %1143 = vst [vmem:[#allocation3 + $0x80] sm:$0xff] %v892
    %1144 = vst [vmem:[#allocation3 + $0x88] sm:$0xff] %v894
    %1145 = vst [vmem:[#allocation3 + $0x90] sm:$0xff] %v1005
    %1146 = vst [vmem:[#allocation3 + $0x98] sm:$0xff] %v1007
    %1147 = vst [vmem:[#allocation3 + $0xa0] sm:$0xff] %v896
    %1148 = vst [vmem:[#allocation3 + $0xa8] sm:$0xff] %v898
    %1149 = vst [vmem:[#allocation3 + $0xb0] sm:$0xff] %v1009
    %1150 = vst [vmem:[#allocation3 + $0xb8] sm:$0xff] %v1011
    %1151 = vst [vmem:[#allocation3 + $0xc0] sm:$0xff] %v902
    %1152 = vst [vmem:[#allocation3 + $0xc8] sm:$0xff] %v904
    %1153 = vst [vmem:[#allocation3 + $0xd0] sm:$0xff] %v1015
    %1154 = vst [vmem:[#allocation3 + $0xd8] sm:$0xff] %v1017
    %1155 = vst [vmem:[#allocation3 + $0xe0] sm:$0xff] %v906
    %1156 = vst [vmem:[#allocation3 + $0xe8] sm:$0xff] %v908
    %1157 = vst [vmem:[#allocation3 + $0xf0] sm:$0xff] %v1019
    %1158 = vst [vmem:[#allocation3 + $0xf8] sm:$0xff] %v1021
    %1159 = vst [vmem:[#allocation3 + $0x100] sm:$0xff] %v912
    %1160 = vst [vmem:[#allocation3 + $0x108] sm:$0xff] %v914
    %1161 = vst [vmem:[#allocation3 + $0x110] sm:$0xff] %v1025
    %1162 = vst [vmem:[#allocation3 + $0x118] sm:$0xff] %v1027
    %1163 = vst [vmem:[#allocation3 + $0x120] sm:$0xff] %v916
    %1164 = vst [vmem:[#allocation3 + $0x128] sm:$0xff] %v918
    %1165 = vst [vmem:[#allocation3 + $0x130] sm:$0xff] %v1029
    %1166 = vst [vmem:[#allocation3 + $0x138] sm:$0xff] %v1031
    %1167 = vst [vmem:[#allocation3 + $0x140] sm:$0xff] %v922
    %1168 = vst [vmem:[#allocation3 + $0x148] sm:$0xff] %v924
    %1169 = vst [vmem:[#allocation3 + $0x150] sm:$0xff] %v1035
    %1170 = vst [vmem:[#allocation3 + $0x158] sm:$0xff] %v1037
    %1171 = vst [vmem:[#allocation3 + $0x160] sm:$0xff] %v926
    %1172 = vst [vmem:[#allocation3 + $0x168] sm:$0xff] %v928
    %1173 = vst [vmem:[#allocation3 + $0x170] sm:$0xff] %v1039
    %1174 = vst [vmem:[#allocation3 + $0x178] sm:$0xff] %v1041
    %1175 = vst [vmem:[#allocation3 + $0x180] sm:$0xff] %v932
    %1176 = vst [vmem:[#allocation3 + $0x188] sm:$0xff] %v934
    %1177 = vst [vmem:[#allocation3 + $0x190] sm:$0xff] %v1045
    %1178 = vst [vmem:[#allocation3 + $0x198] sm:$0xff] %v1047
    %1179 = vst [vmem:[#allocation3 + $0x1a0] sm:$0xff] %v936
    %1180 = vst [vmem:[#allocation3 + $0x1a8] sm:$0xff] %v938
    %1181 = vst [vmem:[#allocation3 + $0x1b0] sm:$0xff] %v1049
    %1182 = vst [vmem:[#allocation3 + $0x1b8] sm:$0xff] %v1051
    %1183 = vst [vmem:[#allocation3 + $0x1c0] sm:$0xff] %v942
    %1184 = vst [vmem:[#allocation3 + $0x1c8] sm:$0xff] %v944
    %1185 = vst [vmem:[#allocation3 + $0x1d0] sm:$0xff] %v1055
    %1186 = vst [vmem:[#allocation3 + $0x1d8] sm:$0xff] %v1057
    %1187 = vst [vmem:[#allocation3 + $0x1e0] sm:$0xff] %v946
    %1188 = vst [vmem:[#allocation3 + $0x1e8] sm:$0xff] %v948
    %1189 = vst [vmem:[#allocation3 + $0x1f0] sm:$0xff] %v1059
    %1190 = vst [vmem:[#allocation3 + $0x1f8] sm:$0xff] %v1061
    %1191 = vst [vmem:[#allocation4] sm:$0xff] 0.0
    %1192 = vst [vmem:[#allocation4 + $0x8] sm:$0xff] 0.0
    %1193 = vst [vmem:[#allocation5] sm:$0xff] 0.0
    %1194 = vst [vmem:[#allocation5 + $0x8] sm:$0xff] 0.0
    %1195 = vst [vmem:[#allocation7] sm:$0xff] 0.0
    %1196 = vst [vmem:[#allocation7 + $0x8] sm:$0xff] 0.0
    %1197 = vst [vmem:[#allocation8] sm:$0xff] 0.0
    %1198 = vst [vmem:[#allocation8 + $0x8] sm:$0xff] 0.0
    %1199 = vst [vmem:[#allocation6] sm:$0xff] -inf
    %1200 = vst [vmem:[#allocation6 + $0x8] sm:$0xff] -inf
    %1201 = vst [vmem:[#allocation9] sm:$0xff] -inf
    %1202 = vst [vmem:[#allocation9 + $0x8] sm:$0xff] -inf
    %v1203 = vld [vmem:[%s1] sm:$0xff]
    %v1204 = vld [vmem:[%s1 + $0x8] sm:$0xff]
    %s1205 = sld [smem:[#allocation11]]
    %v1206 = vld [vmem:[#allocation17] sm:$0xff]
    %v1207 = vld [vmem:[#allocation17 + $0x8] sm:$0xff]
    %v1208 = vld [vmem:[#allocation17 + $0x10] sm:$0xff]
    %v1209 = vld [vmem:[#allocation17 + $0x18] sm:$0xff]
    %v1210 = vld [vmem:[#allocation17 + $0x20] sm:$0xff]
    %v1211 = vld [vmem:[#allocation17 + $0x28] sm:$0xff]
    %v1212 = vld [vmem:[#allocation17 + $0x30] sm:$0xff]
    %v1213 = vld [vmem:[#allocation17 + $0x38] sm:$0xff]
    %v1214 = vld [vmem:[#allocation17 + $0x40] sm:$0xff]
    %v1215 = vld [vmem:[#allocation17 + $0x48] sm:$0xff]
    %v1216 = vld [vmem:[#allocation17 + $0x50] sm:$0xff]
    %v1217 = vld [vmem:[#allocation17 + $0x58] sm:$0xff]
    %v1218 = vld [vmem:[#allocation17 + $0x60] sm:$0xff]
    %v1219 = vld [vmem:[#allocation17 + $0x68] sm:$0xff]
    %v1220 = vld [vmem:[#allocation17 + $0x70] sm:$0xff]
    %v1221 = vld [vmem:[#allocation17 + $0x78] sm:$0xff]
    %v1222 = vld [vmem:[#allocation17 + $0x80] sm:$0xff]
    %v1223 = vld [vmem:[#allocation17 + $0x88] sm:$0xff]
    %v1224 = vld [vmem:[#allocation17 + $0x90] sm:$0xff]
    %v1225 = vld [vmem:[#allocation17 + $0x98] sm:$0xff]
    %v1226 = vld [vmem:[#allocation17 + $0xa0] sm:$0xff]
    %v1227 = vld [vmem:[#allocation17 + $0xa8] sm:$0xff]
    %v1228 = vld [vmem:[#allocation17 + $0xb0] sm:$0xff]
    %v1229 = vld [vmem:[#allocation17 + $0xb8] sm:$0xff]
    %v1230 = vld [vmem:[#allocation17 + $0xc0] sm:$0xff]
    %v1231 = vld [vmem:[#allocation17 + $0xc8] sm:$0xff]
    %v1232 = vld [vmem:[#allocation17 + $0xd0] sm:$0xff]
    %v1233 = vld [vmem:[#allocation17 + $0xd8] sm:$0xff]
    %v1234 = vld [vmem:[#allocation17 + $0xe0] sm:$0xff]
    %v1235 = vld [vmem:[#allocation17 + $0xe8] sm:$0xff]
    %v1236 = vld [vmem:[#allocation17 + $0xf0] sm:$0xff]
    %v1237 = vld [vmem:[#allocation17 + $0xf8] sm:$0xff]
    %v1238 = vld [vmem:[#allocation18] sm:$0xff]
    %v1239 = vld [vmem:[#allocation18 + $0x8] sm:$0xff]
    %v1240 = vld [vmem:[#allocation18 + $0x10] sm:$0xff]
    %v1241 = vld [vmem:[#allocation18 + $0x18] sm:$0xff]
    %v1242 = vld [vmem:[#allocation18 + $0x20] sm:$0xff]
    %v1243 = vld [vmem:[#allocation18 + $0x28] sm:$0xff]
    %v1244 = vld [vmem:[#allocation18 + $0x30] sm:$0xff]
    %v1245 = vld [vmem:[#allocation18 + $0x38] sm:$0xff]
    %v1246 = vld [vmem:[#allocation18 + $0x40] sm:$0xff]
    %v1247 = vld [vmem:[#allocation18 + $0x48] sm:$0xff]
    %v1248 = vld [vmem:[#allocation18 + $0x50] sm:$0xff]
    %v1249 = vld [vmem:[#allocation18 + $0x58] sm:$0xff]
    %v1250 = vld [vmem:[#allocation18 + $0x60] sm:$0xff]
    %v1251 = vld [vmem:[#allocation18 + $0x68] sm:$0xff]
    %v1252 = vld [vmem:[#allocation18 + $0x70] sm:$0xff]
    %v1253 = vld [vmem:[#allocation18 + $0x78] sm:$0xff]
    %v1254 = vld [vmem:[#allocation18 + $0x80] sm:$0xff]
    %v1255 = vld [vmem:[#allocation18 + $0x88] sm:$0xff]
    %v1256 = vld [vmem:[#allocation18 + $0x90] sm:$0xff]
    %v1257 = vld [vmem:[#allocation18 + $0x98] sm:$0xff]
    %v1258 = vld [vmem:[#allocation18 + $0xa0] sm:$0xff]
    %v1259 = vld [vmem:[#allocation18 + $0xa8] sm:$0xff]
    %v1260 = vld [vmem:[#allocation18 + $0xb0] sm:$0xff]
    %v1261 = vld [vmem:[#allocation18 + $0xb8] sm:$0xff]
    %v1262 = vld [vmem:[#allocation18 + $0xc0] sm:$0xff]
    %v1263 = vld [vmem:[#allocation18 + $0xc8] sm:$0xff]
    %v1264 = vld [vmem:[#allocation18 + $0xd0] sm:$0xff]
    %v1265 = vld [vmem:[#allocation18 + $0xd8] sm:$0xff]
    %v1266 = vld [vmem:[#allocation18 + $0xe0] sm:$0xff]
    %v1267 = vld [vmem:[#allocation18 + $0xe8] sm:$0xff]
    %v1268 = vld [vmem:[#allocation18 + $0xf0] sm:$0xff]
    %v1269 = vld [vmem:[#allocation18 + $0xf8] sm:$0xff]
    // While loop
    $region66: #{tpu_custom_call.1} parent=1 // loop_pre_header
      _
    $region67: #{tpu_custom_call.1} parent=1 // loop_header
      %s1271 = sphi 0, %s1273
      %p1272 = scmp.ge.s32.totalorder %s1271, %s1205
    $region68: #{tpu_custom_call.1} parent=1 // loop_header_branch
      %1275 = sbr.rel (%p1272) target = $region72
    $region69: #{tpu_custom_call.1} parent=1 // loop_body
      %s1276 = ssub.s32 %s1205, 1
      %s1277 = ssub.s32 %s1276, %s1271
      %s1278 = smul.u32 %s1271, 16
      %s1279 = sshra.s32 %s1278, 3
      %s1280 = sand.u32 %s1278, 7
      %s1281 = smul.u32 %s1279, 4
      %s1282 = smul.addr %s1281, 8
      %s1283 = scalar_lea.vmem [#allocation2], %s1282
      %v1284 = vld [vmem:[%s1283] sm:$0xff]
      %v1285 = vld [vmem:[%s1283 + $0x8] sm:$0xff]
      %v1286 = vld [vmem:[%s1283 + $0x10] sm:$0xff]
      %v1287 = vld [vmem:[%s1283 + $0x18] sm:$0xff]
      %v1288 = vld [vmem:[%s1283 + $0x20] sm:$0xff]
      %v1289 = vld [vmem:[%s1283 + $0x28] sm:$0xff]
      %v1290 = vld [vmem:[%s1283 + $0x30] sm:$0xff]
      %v1291 = vld [vmem:[%s1283 + $0x38] sm:$0xff]
      %s1292 = smul.u32 %s1277, 16
      %s1293 = sshra.s32 %s1292, 3
      %s1294 = sand.u32 %s1292, 7
      %s1295 = smul.u32 %s1293, 4
      %s1296 = smul.addr %s1295, 8
      %s1297 = scalar_lea.vmem [#allocation3], %s1296
      %v1298 = vld [vmem:[%s1297] sm:$0xff]
      %v1299 = vld [vmem:[%s1297 + $0x8] sm:$0xff]
      %v1300 = vld [vmem:[%s1297 + $0x10] sm:$0xff]
      %v1301 = vld [vmem:[%s1297 + $0x18] sm:$0xff]
      %v1302 = vld [vmem:[%s1297 + $0x20] sm:$0xff]
      %v1303 = vld [vmem:[%s1297 + $0x28] sm:$0xff]
      %v1304 = vld [vmem:[%s1297 + $0x30] sm:$0xff]
      %v1305 = vld [vmem:[%s1297 + $0x38] sm:$0xff]
      %v1306 = vld [vmem:[#allocation4] sm:$0xff]
      %v1307 = vld [vmem:[#allocation4 + $0x8] sm:$0xff]
      %v1308 = vld [vmem:[#allocation5] sm:$0xff]
      %v1309 = vld [vmem:[#allocation5 + $0x8] sm:$0xff]
      %v1310 = vld [vmem:[#allocation7] sm:$0xff]
      %v1311 = vld [vmem:[#allocation7 + $0x8] sm:$0xff]
      %v1312 = vld [vmem:[#allocation8] sm:$0xff]
      %v1313 = vld [vmem:[#allocation8 + $0x8] sm:$0xff]
      %v1314 = vpack.c.bf16 %v1307, %v1306
      %v1347 = vunpack.c.l.b16 %v1206
      %v1348 = vunpack.c.h.b16 %v1206
      %v1349 = vunpack.c.l.b16 %v1207
      %v1350 = vunpack.c.h.b16 %v1207
      %v1351 = vunpack.c.l.b16 %v1208
      %v1352 = vunpack.c.h.b16 %v1208
      %v1353 = vunpack.c.l.b16 %v1209
      %v1354 = vunpack.c.h.b16 %v1209
      %v1355 = vunpack.c.l.b16 %v1210
      %v1356 = vunpack.c.h.b16 %v1210
      %v1357 = vunpack.c.l.b16 %v1211
      %v1358 = vunpack.c.h.b16 %v1211
      %v1359 = vunpack.c.l.b16 %v1212
      %v1360 = vunpack.c.h.b16 %v1212
      %v1361 = vunpack.c.l.b16 %v1213
      %v1362 = vunpack.c.h.b16 %v1213
      %v1363 = vunpack.c.l.b16 %v1214
      %v1364 = vunpack.c.h.b16 %v1214
      %v1365 = vunpack.c.l.b16 %v1215
      %v1366 = vunpack.c.h.b16 %v1215
      %v1367 = vunpack.c.l.b16 %v1216
      %v1368 = vunpack.c.h.b16 %v1216
      %v1369 = vunpack.c.l.b16 %v1217
      %v1370 = vunpack.c.h.b16 %v1217
      %v1371 = vunpack.c.l.b16 %v1218
      %v1372 = vunpack.c.h.b16 %v1218
      %v1373 = vunpack.c.l.b16 %v1219
      %v1374 = vunpack.c.h.b16 %v1219
      %v1375 = vunpack.c.l.b16 %v1220
      %v1376 = vunpack.c.h.b16 %v1220
      %v1377 = vunpack.c.l.b16 %v1221
      %v1378 = vunpack.c.h.b16 %v1221
      %v1379 = vunpack.c.l.b16 %v1222
      %v1380 = vunpack.c.h.b16 %v1222
      %v1381 = vunpack.c.l.b16 %v1223
      %v1382 = vunpack.c.h.b16 %v1223
      %v1383 = vunpack.c.l.b16 %v1224
      %v1384 = vunpack.c.h.b16 %v1224
      %v1385 = vunpack.c.l.b16 %v1225
      %v1386 = vunpack.c.h.b16 %v1225
      %v1387 = vunpack.c.l.b16 %v1226
      %v1388 = vunpack.c.h.b16 %v1226
      %v1389 = vunpack.c.l.b16 %v1227
      %v1390 = vunpack.c.h.b16 %v1227
      %v1391 = vunpack.c.l.b16 %v1228
      %v1392 = vunpack.c.h.b16 %v1228
      %v1393 = vunpack.c.l.b16 %v1229
      %v1394 = vunpack.c.h.b16 %v1229
      %v1395 = vunpack.c.l.b16 %v1230
      %v1396 = vunpack.c.h.b16 %v1230
      %v1397 = vunpack.c.l.b16 %v1231
      %v1398 = vunpack.c.h.b16 %v1231
      %v1399 = vunpack.c.l.b16 %v1232
      %v1400 = vunpack.c.h.b16 %v1232
      %v1401 = vunpack.c.l.b16 %v1233
      %v1402 = vunpack.c.h.b16 %v1233
      %v1403 = vunpack.c.l.b16 %v1234
      %v1404 = vunpack.c.h.b16 %v1234
      %v1405 = vunpack.c.l.b16 %v1235
      %v1406 = vunpack.c.h.b16 %v1235
      %v1407 = vunpack.c.l.b16 %v1236
      %v1408 = vunpack.c.h.b16 %v1236
      %v1409 = vunpack.c.l.b16 %v1237
      %v1410 = vunpack.c.h.b16 %v1237
      %v1411 = vpack.c.b16 %v1351, %v1347
      %v1412 = vpack.c.b16 %v1352, %v1348
      %v1413 = vpack.c.b16 %v1353, %v1349
      %v1414 = vpack.c.b16 %v1354, %v1350
      %v1415 = vpack.c.b16 %v1359, %v1355
      %v1416 = vpack.c.b16 %v1360, %v1356
      %v1417 = vpack.c.b16 %v1361, %v1357
      %v1418 = vpack.c.b16 %v1362, %v1358
      %v1419 = vpack.c.b16 %v1367, %v1363
      %v1420 = vpack.c.b16 %v1368, %v1364
      %v1421 = vpack.c.b16 %v1369, %v1365
      %v1422 = vpack.c.b16 %v1370, %v1366
      %v1423 = vpack.c.b16 %v1375, %v1371
      %v1424 = vpack.c.b16 %v1376, %v1372
      %v1425 = vpack.c.b16 %v1377, %v1373
      %v1426 = vpack.c.b16 %v1378, %v1374
      %v1427 = vpack.c.b16 %v1383, %v1379
      %v1428 = vpack.c.b16 %v1384, %v1380
      %v1429 = vpack.c.b16 %v1385, %v1381
      %v1430 = vpack.c.b16 %v1386, %v1382
      %v1431 = vpack.c.b16 %v1391, %v1387
      %v1432 = vpack.c.b16 %v1392, %v1388
      %v1433 = vpack.c.b16 %v1393, %v1389
      %v1434 = vpack.c.b16 %v1394, %v1390
      %v1435 = vpack.c.b16 %v1399, %v1395
      %v1436 = vpack.c.b16 %v1400, %v1396
      %v1437 = vpack.c.b16 %v1401, %v1397
      %v1438 = vpack.c.b16 %v1402, %v1398
      %v1439 = vpack.c.b16 %v1407, %v1403
      %v1440 = vpack.c.b16 %v1408, %v1404
      %v1441 = vpack.c.b16 %v1409, %v1405
      %v1442 = vpack.c.b16 %v1410, %v1406
      %1475 = vmatprep.subr.bf16.mxu0 %v1412
      %1476 = vmatpush1.bf16.msra.mxu0 %v1411
      %1477 = vmatprep.subr.bf16.mxu0 %v1416
      %1478 = vmatpush1.bf16.msra.mxu0 %v1415
      %1479 = vmatprep.subr.bf16.mxu0 %v1420
      %1480 = vmatpush1.bf16.msra.mxu0 %v1419
      %1481 = vmatprep.subr.bf16.mxu0 %v1424
      %1482 = vmatpush1.bf16.msra.mxu0 %v1423
      %1483 = vmatprep.subr.bf16.mxu0 %v1428
      %1484 = vmatpush1.bf16.msra.mxu0 %v1427
      %1485 = vmatprep.subr.bf16.mxu0 %v1432
      %1486 = vmatpush1.bf16.msra.mxu0 %v1431
      %1487 = vmatprep.subr.bf16.mxu0 %v1436
      %1488 = vmatpush1.bf16.msra.mxu0 %v1435
      %1489 = vmatprep.subr.bf16.mxu0 %v1440
      %1490 = vmatpush1.bf16.msra.mxu0 %v1439
      %1491 = vmatprep.subr.bf16.mxu0 0
      %1492 = vmatpush1.bf16.msra.mxu0 0
      %1493 = vmatprep.subr.bf16.mxu0 0
      %1494 = vmatpush1.bf16.msra.mxu0 0
      %1495 = vmatprep.subr.bf16.mxu0 0
      %1496 = vmatpush1.bf16.msra.mxu0 0
      %1497 = vmatprep.subr.bf16.mxu0 0
      %1498 = vmatpush1.bf16.msra.mxu0 0
      %1499 = vmatprep.subr.bf16.mxu0 0
      %1500 = vmatpush1.bf16.msra.mxu0 0
      %1501 = vmatprep.subr.bf16.mxu0 0
      %1502 = vmatpush1.bf16.msra.mxu0 0
      %1503 = vmatprep.subr.bf16.mxu0 0
      %1504 = vmatpush1.bf16.msra.mxu0 0
      %1505 = vmatprep.subr.bf16.mxu0 0
      %1506 = vmatpush1.bf16.msra.mxu0 0
      %1507 = vmatprep.mubr.bf16.mxu0 0
      %1508 = vmatmul.mubr.bf16.gmra.mrb[0].mxu0 %v1314
      %v1509 = vpop.f32.mrb[0].mxu0
      %v1510 = vadd.f32 0.0, %v1509
      %v1511 = vpop.f32.mrb[0].mxu0
      %v1512 = vadd.f32 0.0, %v1511
      %v1513 = vpop.f32.mrb[0].mxu0
      %v1514 = vadd.f32 0.0, %v1513
      %v1515 = vpop.f32.mrb[0].mxu0
      %v1516 = vadd.f32 0.0, %v1515
      %1517 = vdwg.mxu0
      %1518 = vmatprep.subr.bf16.mxu0 %v1414
      %1519 = vmatpush1.bf16.msra.mxu0 %v1413
      %1520 = vmatprep.subr.bf16.mxu0 %v1418
      %1521 = vmatpush1.bf16.msra.mxu0 %v1417
      %1522 = vmatprep.subr.bf16.mxu0 %v1422
      %1523 = vmatpush1.bf16.msra.mxu0 %v1421
      %1524 = vmatprep.subr.bf16.mxu0 %v1426
      %1525 = vmatpush1.bf16.msra.mxu0 %v1425
      %1526 = vmatprep.subr.bf16.mxu0 %v1430
      %1527 = vmatpush1.bf16.msra.mxu0 %v1429
      %1528 = vmatprep.subr.bf16.mxu0 %v1434
      %1529 = vmatpush1.bf16.msra.mxu0 %v1433
      %1530 = vmatprep.subr.bf16.mxu0 %v1438
      %1531 = vmatpush1.bf16.msra.mxu0 %v1437
      %1532 = vmatprep.subr.bf16.mxu0 %v1442
      %1533 = vmatpush1.bf16.msra.mxu0 %v1441
      %1534 = vmatprep.subr.bf16.mxu0 0
      %1535 = vmatpush1.bf16.msra.mxu0 0
      %1536 = vmatprep.subr.bf16.mxu0 0
      %1537 = vmatpush1.bf16.msra.mxu0 0
      %1538 = vmatprep.subr.bf16.mxu0 0
      %1539 = vmatpush1.bf16.msra.mxu0 0
      %1540 = vmatprep.subr.bf16.mxu0 0
      %1541 = vmatpush1.bf16.msra.mxu0 0
      %1542 = vmatprep.subr.bf16.mxu0 0
      %1543 = vmatpush1.bf16.msra.mxu0 0
      %1544 = vmatprep.subr.bf16.mxu0 0
      %1545 = vmatpush1.bf16.msra.mxu0 0
      %1546 = vmatprep.subr.bf16.mxu0 0
      %1547 = vmatpush1.bf16.msra.mxu0 0
      %1548 = vmatprep.subr.bf16.mxu0 0
      %1549 = vmatpush1.bf16.msra.mxu0 0
      %1550 = vmatprep.mubr.bf16.mxu0 0
      %1551 = vmatmul.mubr.bf16.gmra.mrb[0].mxu0 %v1314
      %v1552 = vpop.f32.mrb[0].mxu0
      %v1553 = vadd.f32 0.0, %v1552
      %v1554 = vpop.f32.mrb[0].mxu0
      %v1555 = vadd.f32 0.0, %v1554
      %v1556 = vpop.f32.mrb[0].mxu0
      %v1557 = vadd.f32 0.0, %v1556
      %v1558 = vpop.f32.mrb[0].mxu0
      %v1559 = vadd.f32 0.0, %v1558
      %1560 = vdwg.mxu0
      %v1561 = vpack.c.bf16 %v1311, %v1310
      %v1594 = vunpack.c.l.b16 %v1238
      %v1595 = vunpack.c.h.b16 %v1238
      %v1596 = vunpack.c.l.b16 %v1239
      %v1597 = vunpack.c.h.b16 %v1239
      %v1598 = vunpack.c.l.b16 %v1240
      %v1599 = vunpack.c.h.b16 %v1240
      %v1600 = vunpack.c.l.b16 %v1241
      %v1601 = vunpack.c.h.b16 %v1241
      %v1602 = vunpack.c.l.b16 %v1242
      %v1603 = vunpack.c.h.b16 %v1242
      %v1604 = vunpack.c.l.b16 %v1243
      %v1605 = vunpack.c.h.b16 %v1243
      %v1606 = vunpack.c.l.b16 %v1244
      %v1607 = vunpack.c.h.b16 %v1244
      %v1608 = vunpack.c.l.b16 %v1245
      %v1609 = vunpack.c.h.b16 %v1245
      %v1610 = vunpack.c.l.b16 %v1246
      %v1611 = vunpack.c.h.b16 %v1246
      %v1612 = vunpack.c.l.b16 %v1247
      %v1613 = vunpack.c.h.b16 %v1247
      %v1614 = vunpack.c.l.b16 %v1248
      %v1615 = vunpack.c.h.b16 %v1248
      %v1616 = vunpack.c.l.b16 %v1249
      %v1617 = vunpack.c.h.b16 %v1249
      %v1618 = vunpack.c.l.b16 %v1250
      %v1619 = vunpack.c.h.b16 %v1250
      %v1620 = vunpack.c.l.b16 %v1251
      %v1621 = vunpack.c.h.b16 %v1251
      %v1622 = vunpack.c.l.b16 %v1252
      %v1623 = vunpack.c.h.b16 %v1252
      %v1624 = vunpack.c.l.b16 %v1253
      %v1625 = vunpack.c.h.b16 %v1253
      %v1626 = vunpack.c.l.b16 %v1254
      %v1627 = vunpack.c.h.b16 %v1254
      %v1628 = vunpack.c.l.b16 %v1255
      %v1629 = vunpack.c.h.b16 %v1255
      %v1630 = vunpack.c.l.b16 %v1256
      %v1631 = vunpack.c.h.b16 %v1256
      %v1632 = vunpack.c.l.b16 %v1257
      %v1633 = vunpack.c.h.b16 %v1257
      %v1634 = vunpack.c.l.b16 %v1258
      %v1635 = vunpack.c.h.b16 %v1258
      %v1636 = vunpack.c.l.b16 %v1259
      %v1637 = vunpack.c.h.b16 %v1259
      %v1638 = vunpack.c.l.b16 %v1260
      %v1639 = vunpack.c.h.b16 %v1260
      %v1640 = vunpack.c.l.b16 %v1261
      %v1641 = vunpack.c.h.b16 %v1261
      %v1642 = vunpack.c.l.b16 %v1262
      %v1643 = vunpack.c.h.b16 %v1262
      %v1644 = vunpack.c.l.b16 %v1263
      %v1645 = vunpack.c.h.b16 %v1263
      %v1646 = vunpack.c.l.b16 %v1264
      %v1647 = vunpack.c.h.b16 %v1264
      %v1648 = vunpack.c.l.b16 %v1265
      %v1649 = vunpack.c.h.b16 %v1265
      %v1650 = vunpack.c.l.b16 %v1266
      %v1651 = vunpack.c.h.b16 %v1266
      %v1652 = vunpack.c.l.b16 %v1267
      %v1653 = vunpack.c.h.b16 %v1267
      %v1654 = vunpack.c.l.b16 %v1268
      %v1655 = vunpack.c.h.b16 %v1268
      %v1656 = vunpack.c.l.b16 %v1269
      %v1657 = vunpack.c.h.b16 %v1269
      %v1658 = vpack.c.b16 %v1598, %v1594
      %v1659 = vpack.c.b16 %v1599, %v1595
      %v1660 = vpack.c.b16 %v1600, %v1596
      %v1661 = vpack.c.b16 %v1601, %v1597
      %v1662 = vpack.c.b16 %v1606, %v1602
      %v1663 = vpack.c.b16 %v1607, %v1603
      %v1664 = vpack.c.b16 %v1608, %v1604
      %v1665 = vpack.c.b16 %v1609, %v1605
      %v1666 = vpack.c.b16 %v1614, %v1610
      %v1667 = vpack.c.b16 %v1615, %v1611
      %v1668 = vpack.c.b16 %v1616, %v1612
      %v1669 = vpack.c.b16 %v1617, %v1613
      %v1670 = vpack.c.b16 %v1622, %v1618
      %v1671 = vpack.c.b16 %v1623, %v1619
      %v1672 = vpack.c.b16 %v1624, %v1620
      %v1673 = vpack.c.b16 %v1625, %v1621
      %v1674 = vpack.c.b16 %v1630, %v1626
      %v1675 = vpack.c.b16 %v1631, %v1627
      %v1676 = vpack.c.b16 %v1632, %v1628
      %v1677 = vpack.c.b16 %v1633, %v1629
      %v1678 = vpack.c.b16 %v1638, %v1634
      %v1679 = vpack.c.b16 %v1639, %v1635
      %v1680 = vpack.c.b16 %v1640, %v1636
      %v1681 = vpack.c.b16 %v1641, %v1637
      %v1682 = vpack.c.b16 %v1646, %v1642
      %v1683 = vpack.c.b16 %v1647, %v1643
      %v1684 = vpack.c.b16 %v1648, %v1644
      %v1685 = vpack.c.b16 %v1649, %v1645
      %v1686 = vpack.c.b16 %v1654, %v1650
      %v1687 = vpack.c.b16 %v1655, %v1651
      %v1688 = vpack.c.b16 %v1656, %v1652
      %v1689 = vpack.c.b16 %v1657, %v1653
      %1722 = vmatprep.subr.bf16.mxu0 %v1659
      %1723 = vmatpush1.bf16.msra.mxu0 %v1658
      %1724 = vmatprep.subr.bf16.mxu0 %v1663
      %1725 = vmatpush1.bf16.msra.mxu0 %v1662
      %1726 = vmatprep.subr.bf16.mxu0 %v1667
      %1727 = vmatpush1.bf16.msra.mxu0 %v1666
      %1728 = vmatprep.subr.bf16.mxu0 %v1671
      %1729 = vmatpush1.bf16.msra.mxu0 %v1670
      %1730 = vmatprep.subr.bf16.mxu0 %v1675
      %1731 = vmatpush1.bf16.msra.mxu0 %v1674
      %1732 = vmatprep.subr.bf16.mxu0 %v1679
      %1733 = vmatpush1.bf16.msra.mxu0 %v1678
      %1734 = vmatprep.subr.bf16.mxu0 %v1683
      %1735 = vmatpush1.bf16.msra.mxu0 %v1682
      %1736 = vmatprep.subr.bf16.mxu0 %v1687
      %1737 = vmatpush1.bf16.msra.mxu0 %v1686
      %1738 = vmatprep.subr.bf16.mxu0 0
      %1739 = vmatpush1.bf16.msra.mxu0 0
      %1740 = vmatprep.subr.bf16.mxu0 0
      %1741 = vmatpush1.bf16.msra.mxu0 0
      %1742 = vmatprep.subr.bf16.mxu0 0
      %1743 = vmatpush1.bf16.msra.mxu0 0
      %1744 = vmatprep.subr.bf16.mxu0 0
      %1745 = vmatpush1.bf16.msra.mxu0 0
      %1746 = vmatprep.subr.bf16.mxu0 0
      %1747 = vmatpush1.bf16.msra.mxu0 0
      %1748 = vmatprep.subr.bf16.mxu0 0
      %1749 = vmatpush1.bf16.msra.mxu0 0
      %1750 = vmatprep.subr.bf16.mxu0 0
      %1751 = vmatpush1.bf16.msra.mxu0 0
      %1752 = vmatprep.subr.bf16.mxu0 0
      %1753 = vmatpush1.bf16.msra.mxu0 0
      %1754 = vmatprep.mubr.bf16.mxu0 0
      %1755 = vmatmul.mubr.bf16.gmra.mrb[0].mxu0 %v1561
      %v1756 = vpop.f32.mrb[0].mxu0
      %v1757 = vadd.f32 0.0, %v1756
      %v1758 = vpop.f32.mrb[0].mxu0
      %v1759 = vadd.f32 0.0, %v1758
      %v1760 = vpop.f32.mrb[0].mxu0
      %v1761 = vadd.f32 0.0, %v1760
      %v1762 = vpop.f32.mrb[0].mxu0
      %v1763 = vadd.f32 0.0, %v1762
      %1764 = vdwg.mxu0
      %1765 = vmatprep.subr.bf16.mxu0 %v1661
      %1766 = vmatpush1.bf16.msra.mxu0 %v1660
      %1767 = vmatprep.subr.bf16.mxu0 %v1665
      %1768 = vmatpush1.bf16.msra.mxu0 %v1664
      %1769 = vmatprep.subr.bf16.mxu0 %v1669
      %1770 = vmatpush1.bf16.msra.mxu0 %v1668
      %1771 = vmatprep.subr.bf16.mxu0 %v1673
      %1772 = vmatpush1.bf16.msra.mxu0 %v1672
      %1773 = vmatprep.subr.bf16.mxu0 %v1677
      %1774 = vmatpush1.bf16.msra.mxu0 %v1676
      %1775 = vmatprep.subr.bf16.mxu0 %v1681
      %1776 = vmatpush1.bf16.msra.mxu0 %v1680
      %1777 = vmatprep.subr.bf16.mxu0 %v1685
      %1778 = vmatpush1.bf16.msra.mxu0 %v1684
      %1779 = vmatprep.subr.bf16.mxu0 %v1689
      %1780 = vmatpush1.bf16.msra.mxu0 %v1688
      %1781 = vmatprep.subr.bf16.mxu0 0
      %1782 = vmatpush1.bf16.msra.mxu0 0
      %1783 = vmatprep.subr.bf16.mxu0 0
      %1784 = vmatpush1.bf16.msra.mxu0 0
      %1785 = vmatprep.subr.bf16.mxu0 0
      %1786 = vmatpush1.bf16.msra.mxu0 0
      %1787 = vmatprep.subr.bf16.mxu0 0
      %1788 = vmatpush1.bf16.msra.mxu0 0
      %1789 = vmatprep.subr.bf16.mxu0 0
      %1790 = vmatpush1.bf16.msra.mxu0 0
      %1791 = vmatprep.subr.bf16.mxu0 0
      %1792 = vmatpush1.bf16.msra.mxu0 0
      %1793 = vmatprep.subr.bf16.mxu0 0
      %1794 = vmatpush1.bf16.msra.mxu0 0
      %1795 = vmatprep.subr.bf16.mxu0 0
      %1796 = vmatpush1.bf16.msra.mxu0 0
      %1797 = vmatprep.mubr.bf16.mxu0 0
      %1798 = vmatmul.mubr.bf16.gmra.mrb[0].mxu0 %v1561
      %v1799 = vpop.f32.mrb[0].mxu0
      %v1800 = vadd.f32 0.0, %v1799
      %v1801 = vpop.f32.mrb[0].mxu0
      %v1802 = vadd.f32 0.0, %v1801
      %v1803 = vpop.f32.mrb[0].mxu0
      %v1804 = vadd.f32 0.0, %v1803
      %v1805 = vpop.f32.mrb[0].mxu0
      %v1806 = vadd.f32 0.0, %v1805
      %1807 = vdwg.mxu0
      %v1808 = vadd.f32 %v1284, %v1510
      %v1809 = vadd.f32 %v1285, %v1512
      %v1810 = vadd.f32 %v1286, %v1553
      %v1811 = vadd.f32 %v1287, %v1555
      %v1812 = vadd.f32 %v1288, %v1514
      %v1813 = vadd.f32 %v1289, %v1516
      %v1814 = vadd.f32 %v1290, %v1557
      %v1815 = vadd.f32 %v1291, %v1559
      %v1816 = vxor.u32 %v1808, 2147483648
      %v1817 = vxor.u32 %v1809, 2147483648
      %v1818 = vxor.u32 %v1810, 2147483648
      %v1819 = vxor.u32 %v1812, 2147483648
      %v1820 = vxor.u32 %v1813, 2147483648
      %v1821 = vxor.u32 %v1814, 2147483648
      %v1822 = vmul.f32 %v1816, 1.442695
      %v1823 = vpow.pop %v1822
      %v1824 = vmul.f32 %v1817, 1.442695
      %v1825 = vpow.pop %v1824
      %v1826 = vmul.f32 %v1818, 1.442695
      %v1827 = vpow.pop %v1826
      %v1828 = vmul.f32 %v1819, 1.442695
      %v1829 = vpow.pop %v1828
      %v1830 = vmul.f32 %v1820, 1.442695
      %v1831 = vpow.pop %v1830
      %v1832 = vmul.f32 %v1821, 1.442695
      %v1833 = vpow.pop %v1832
      %v1834 = vadd.f32 %v1823, 1.0
      %v1835 = vadd.f32 %v1825, 1.0
      %v1836 = vadd.f32 %v1827, 1.0
      %v1837 = vadd.f32 %v1829, 1.0
      %v1838 = vadd.f32 %v1831, 1.0
      %v1839 = vadd.f32 %v1833, 1.0
      %v1840 = vrcp.pop %v1834
      %v1841 = vmul.f32 1.0, %v1840
      %v1842 = vrcp.pop %v1835
      %v1843 = vmul.f32 1.0, %v1842
      %v1844 = vrcp.pop %v1836
      %v1845 = vmul.f32 1.0, %v1844
      %v1846 = vrcp.pop %v1837
      %v1847 = vmul.f32 1.0, %v1846
      %v1848 = vrcp.pop %v1838
      %v1849 = vmul.f32 1.0, %v1848
      %v1850 = vrcp.pop %v1839
      %v1851 = vmul.f32 1.0, %v1850
      %v1852 = vtanh.pop %v1811
      %v1853 = vtanh.pop %v1815
      %v1854 = vmul.f32 %v1843, %v1308
      %v1855 = vmul.f32 %v1849, %v1309
      %v1856 = vmul.f32 %v1841, %v1852
      %v1857 = vmul.f32 %v1847, %v1853
      %v1858 = vadd.f32 %v1854, %v1856
      %v1859 = vadd.f32 %v1855, %v1857
      %v1860 = vtanh.pop %v1858
      %v1861 = vtanh.pop %v1859
      %v1862 = vmul.f32 %v1845, %v1860
      %v1863 = vmul.f32 %v1851, %v1861
      %v1864 = vadd.f32 %v1298, %v1757
      %v1865 = vadd.f32 %v1299, %v1759
      %v1866 = vadd.f32 %v1300, %v1800
      %v1867 = vadd.f32 %v1301, %v1802
      %v1868 = vadd.f32 %v1302, %v1761
      %v1869 = vadd.f32 %v1303, %v1763
      %v1870 = vadd.f32 %v1304, %v1804
      %v1871 = vadd.f32 %v1305, %v1806
      %v1872 = vxor.u32 %v1864, 2147483648
      %v1873 = vxor.u32 %v1865, 2147483648
      %v1874 = vxor.u32 %v1866, 2147483648
      %v1875 = vxor.u32 %v1868, 2147483648
      %v1876 = vxor.u32 %v1869, 2147483648
      %v1877 = vxor.u32 %v1870, 2147483648
      %v1878 = vmul.f32 %v1872, 1.442695
      %v1879 = vpow.pop %v1878
      %v1880 = vmul.f32 %v1873, 1.442695
      %v1881 = vpow.pop %v1880
      %v1882 = vmul.f32 %v1874, 1.442695
      %v1883 = vpow.pop %v1882
      %v1884 = vmul.f32 %v1875, 1.442695
      %v1885 = vpow.pop %v1884
      %v1886 = vmul.f32 %v1876, 1.442695
      %v1887 = vpow.pop %v1886
      %v1888 = vmul.f32 %v1877, 1.442695
      %v1889 = vpow.pop %v1888
      %v1890 = vadd.f32 %v1879, 1.0
      %v1891 = vadd.f32 %v1881, 1.0
      %v1892 = vadd.f32 %v1883, 1.0
      %v1893 = vadd.f32 %v1885, 1.0
      %v1894 = vadd.f32 %v1887, 1.0
      %v1895 = vadd.f32 %v1889, 1.0
      %v1896 = vrcp.pop %v1890
      %v1897 = vmul.f32 1.0, %v1896
      %v1898 = vrcp.pop %v1891
      %v1899 = vmul.f32 1.0, %v1898
      %v1900 = vrcp.pop %v1892
      %v1901 = vmul.f32 1.0, %v1900
      %v1902 = vrcp.pop %v1893
      %v1903 = vmul.f32 1.0, %v1902
      %v1904 = vrcp.pop %v1894
      %v1905 = vmul.f32 1.0, %v1904
      %v1906 = vrcp.pop %v1895
      %v1907 = vmul.f32 1.0, %v1906
      %v1908 = vtanh.pop %v1867
      %v1909 = vtanh.pop %v1871
      %v1910 = vmul.f32 %v1899, %v1312
      %v1911 = vmul.f32 %v1905, %v1313
      %v1912 = vmul.f32 %v1897, %v1908
      %v1913 = vmul.f32 %v1903, %v1909
      %v1914 = vadd.f32 %v1910, %v1912
      %v1915 = vadd.f32 %v1911, %v1913
      %v1916 = vtanh.pop %v1914
      %v1917 = vtanh.pop %v1915
      %v1918 = vmul.f32 %v1901, %v1916
      %v1919 = vmul.f32 %v1907, %v1917
      %v1920 = vstv %s1271
      %vm1921 = vcmp.lt.s32.totalorder %v1920, %v1203
      %vm1922 = vcmp.lt.s32.totalorder %v1920, %v1204
      %v1923 = vstv %s1277
      %vm1924 = vcmp.lt.s32.totalorder %v1923, %v1203
      %vm1925 = vcmp.lt.s32.totalorder %v1923, %v1204
      %v1926 = vsel %vm1921, 1, 0
      %v1927 = vsel %vm1922, 1, 0
      %1928 = vset.pattern.permute.xlu0 0
      %1929 = vperm.xlu0 %1928, %v1926
      %v1930 = vpop.permute.xlu0 %1929
      %1931 = vset.pattern.permute.xlu0 0
      %1932 = vperm.xlu0 %1931, %v1927
      %v1933 = vpop.permute.xlu0 %1932
      %vm1934 = vcmp.eq.s32.totalorder %v1930, 1
      %vm1935 = vcmp.eq.s32.totalorder %v1933, 1
      %v1936 = vsel %vm1934, %v1862, %v1306
      %v1937 = vsel %vm1935, %v1863, %v1307
      %v1938 = vsel %vm1934, %v1858, %v1308
      %v1939 = vsel %vm1935, %v1859, %v1309
      %v1940 = vsel %vm1924, 1, 0
      %v1941 = vsel %vm1925, 1, 0
      %1942 = vset.pattern.permute.xlu0 0
      %1943 = vperm.xlu0 %1942, %v1940
      %v1944 = vpop.permute.xlu0 %1943
      %1945 = vset.pattern.permute.xlu0 0
      %1946 = vperm.xlu0 %1945, %v1941
      %v1947 = vpop.permute.xlu0 %1946
      %vm1948 = vcmp.eq.s32.totalorder %v1944, 1
      %vm1949 = vcmp.eq.s32.totalorder %v1947, 1
      %v1950 = vsel %vm1948, %v1918, %v1310
      %v1951 = vsel %vm1949, %v1919, %v1311
      %v1952 = vsel %vm1948, %v1914, %v1312
      %v1953 = vsel %vm1949, %v1915, %v1313
      %1954 = vst [vmem:[#allocation4] sm:$0xff] %v1936
      %1955 = vst [vmem:[#allocation4 + $0x8] sm:$0xff] %v1937
      %1956 = vst [vmem:[#allocation5] sm:$0xff] %v1938
      %1957 = vst [vmem:[#allocation5 + $0x8] sm:$0xff] %v1939
      %1958 = vst [vmem:[#allocation7] sm:$0xff] %v1950
      %1959 = vst [vmem:[#allocation7 + $0x8] sm:$0xff] %v1951
      %1960 = vst [vmem:[#allocation8] sm:$0xff] %v1952
      %1961 = vst [vmem:[#allocation8 + $0x8] sm:$0xff] %v1953
      %v1962 = vld [vmem:[#allocation6] sm:$0xff]
      %v1963 = vld [vmem:[#allocation6 + $0x8] sm:$0xff]
      %v1964 = vsel %vm1934, %v1862, -inf
      %v1965 = vsel %vm1935, %v1863, -inf
      %v1966 = vmax.f32 %v1962, %v1964
      %v1967 = vmax.f32 %v1963, %v1965
      %1968 = vst [vmem:[#allocation6] sm:$0xff] %v1966
      %1969 = vst [vmem:[#allocation6 + $0x8] sm:$0xff] %v1967
      %v1970 = vld [vmem:[#allocation9] sm:$0xff]
      %v1971 = vld [vmem:[#allocation9 + $0x8] sm:$0xff]
      %v1972 = vsel %vm1948, %v1918, -inf
      %v1973 = vsel %vm1949, %v1919, -inf
      %v1974 = vmax.f32 %v1970, %v1972
      %v1975 = vmax.f32 %v1971, %v1973
      %1976 = vst [vmem:[#allocation9] sm:$0xff] %v1974
      %1977 = vst [vmem:[#allocation9 + $0x8] sm:$0xff] %v1975
    $region70: #{tpu_custom_call.1} parent=1 // loop_footer
      %s1273 = sadd.s32 %s1271, 1
    $region71: #{tpu_custom_call.1} parent=1 // loop_footer_branch
      %1270 = sbr.rel target = $region67
    $region72: #{tpu_custom_call.1} parent=1 // loop_exit
      _
    %v1978 = vld [vmem:[#allocation6] sm:$0xff]
    %v1979 = vld [vmem:[#allocation6 + $0x8] sm:$0xff]
    %v1980 = vld [vmem:[#allocation9] sm:$0xff]
    %v1981 = vld [vmem:[#allocation9 + $0x8] sm:$0xff]
    %v1982 = vstv %s1205
    %vm1983 = vcmp.lt.s32.totalorder %v1203, %v1982
    %vm1984 = vcmp.lt.s32.totalorder %v1204, %v1982
    %v1985 = vmax.f32 %v1978, 0.0
    %v1986 = vmax.f32 %v1979, 0.0
    %v1987 = vsel %vm1983, 1, 0
    %v1988 = vsel %vm1984, 1, 0
    %1989 = vset.pattern.permute.xlu0 0
    %1990 = vperm.xlu0 %1989, %v1987
    %v1991 = vpop.permute.xlu0 %1990
    %1992 = vset.pattern.permute.xlu0 0
    %1993 = vperm.xlu0 %1992, %v1988
    %v1994 = vpop.permute.xlu0 %1993
    %vm1995 = vcmp.eq.s32.totalorder %v1991, 1
    %vm1996 = vcmp.eq.s32.totalorder %v1994, 1
    %v1997 = vsel %vm1995, %v1985, %v1978
    %v1998 = vsel %vm1996, %v1986, %v1979
    %v1999 = vmax.f32 %v1980, 0.0
    %v2000 = vmax.f32 %v1981, 0.0
    %v2001 = vsel %vm1995, %v1999, %v1980
    %v2002 = vsel %vm1996, %v2000, %v1981
    %v2003 = vpack.c.bf16 %v1998, %v1997
    %v2004 = vpack.c.bf16 %v2002, %v2001
    %v2005 = vld [vmem:[#allocation20] sm:$0xff]
    %v2006 = vld [vmem:[#allocation20 + $0x8] sm:$0xff]
    %v2007 = vld [vmem:[#allocation20 + $0x10] sm:$0xff]
    %v2008 = vld [vmem:[#allocation20 + $0x18] sm:$0xff]
    %v2009 = vld [vmem:[#allocation20 + $0x20] sm:$0xff]
    %v2010 = vld [vmem:[#allocation20 + $0x28] sm:$0xff]
    %v2011 = vld [vmem:[#allocation20 + $0x30] sm:$0xff]
    %v2012 = vld [vmem:[#allocation20 + $0x38] sm:$0xff]
    %v2013 = vld [vmem:[#allocation20 + $0x40] sm:$0xff]
    %v2014 = vld [vmem:[#allocation20 + $0x48] sm:$0xff]
    %v2015 = vld [vmem:[#allocation20 + $0x50] sm:$0xff]
    %v2016 = vld [vmem:[#allocation20 + $0x58] sm:$0xff]
    %v2017 = vld [vmem:[#allocation20 + $0x60] sm:$0xff]
    %v2018 = vld [vmem:[#allocation20 + $0x68] sm:$0xff]
    %v2019 = vld [vmem:[#allocation20 + $0x70] sm:$0xff]
    %v2020 = vld [vmem:[#allocation20 + $0x78] sm:$0xff]
    %v2021 = vld [vmem:[#allocation20 + $0x80] sm:$0xff]
    %v2022 = vld [vmem:[#allocation20 + $0x88] sm:$0xff]
    %v2023 = vld [vmem:[#allocation20 + $0x90] sm:$0xff]
    %v2024 = vld [vmem:[#allocation20 + $0x98] sm:$0xff]
    %v2025 = vld [vmem:[#allocation20 + $0xa0] sm:$0xff]
    %v2026 = vld [vmem:[#allocation20 + $0xa8] sm:$0xff]
    %v2027 = vld [vmem:[#allocation20 + $0xb0] sm:$0xff]
    %v2028 = vld [vmem:[#allocation20 + $0xb8] sm:$0xff]
    %v2029 = vld [vmem:[#allocation20 + $0xc0] sm:$0xff]
    %v2030 = vld [vmem:[#allocation20 + $0xc8] sm:$0xff]
    %v2031 = vld [vmem:[#allocation20 + $0xd0] sm:$0xff]
    %v2032 = vld [vmem:[#allocation20 + $0xd8] sm:$0xff]
    %v2033 = vld [vmem:[#allocation20 + $0xe0] sm:$0xff]
    %v2034 = vld [vmem:[#allocation20 + $0xe8] sm:$0xff]
    %v2035 = vld [vmem:[#allocation20 + $0xf0] sm:$0xff]
    %v2036 = vld [vmem:[#allocation20 + $0xf8] sm:$0xff]
    %v2037 = vld [vmem:[%s8] sm:$0x3]
    %v2039 = vlaneseq
    %v2040 = vshrl.u32 %v2039, 7
    %v2041 = vsub.s32 0, %v2040
    %v2042 = vrot.slane %v2037, %v2041
    %v2043 = vlaneseq
    %v2044 = vshrl.u32 %v2043, 7
    %v2045 = vsub.s32 1, %v2044
    %v2046 = vrot.slane %v2037, %v2045
    %v2081 = vunpack.c.l.b16 %v2005
    %v2082 = vunpack.c.h.b16 %v2005
    %v2083 = vunpack.c.l.b16 %v2006
    %v2084 = vunpack.c.h.b16 %v2006
    %v2085 = vunpack.c.l.b16 %v2007
    %v2086 = vunpack.c.h.b16 %v2007
    %v2087 = vunpack.c.l.b16 %v2008
    %v2088 = vunpack.c.h.b16 %v2008
    %v2089 = vunpack.c.l.b16 %v2009
    %v2090 = vunpack.c.h.b16 %v2009
    %v2091 = vunpack.c.l.b16 %v2010
    %v2092 = vunpack.c.h.b16 %v2010
    %v2093 = vunpack.c.l.b16 %v2011
    %v2094 = vunpack.c.h.b16 %v2011
    %v2095 = vunpack.c.l.b16 %v2012
    %v2096 = vunpack.c.h.b16 %v2012
    %v2097 = vunpack.c.l.b16 %v2013
    %v2098 = vunpack.c.h.b16 %v2013
    %v2099 = vunpack.c.l.b16 %v2014
    %v2100 = vunpack.c.h.b16 %v2014
    %v2101 = vunpack.c.l.b16 %v2015
    %v2102 = vunpack.c.h.b16 %v2015
    %v2103 = vunpack.c.l.b16 %v2016
    %v2104 = vunpack.c.h.b16 %v2016
    %v2105 = vunpack.c.l.b16 %v2017
    %v2106 = vunpack.c.h.b16 %v2017
    %v2107 = vunpack.c.l.b16 %v2018
    %v2108 = vunpack.c.h.b16 %v2018
    %v2109 = vunpack.c.l.b16 %v2019
    %v2110 = vunpack.c.h.b16 %v2019
    %v2111 = vunpack.c.l.b16 %v2020
    %v2112 = vunpack.c.h.b16 %v2020
    %v2113 = vunpack.c.l.b16 %v2021
    %v2114 = vunpack.c.h.b16 %v2021
    %v2115 = vunpack.c.l.b16 %v2022
    %v2116 = vunpack.c.h.b16 %v2022
    %v2117 = vunpack.c.l.b16 %v2023
    %v2118 = vunpack.c.h.b16 %v2023
    %v2119 = vunpack.c.l.b16 %v2024
    %v2120 = vunpack.c.h.b16 %v2024
    %v2121 = vunpack.c.l.b16 %v2025
    %v2122 = vunpack.c.h.b16 %v2025
    %v2123 = vunpack.c.l.b16 %v2026
    %v2124 = vunpack.c.h.b16 %v2026
    %v2125 = vunpack.c.l.b16 %v2027
    %v2126 = vunpack.c.h.b16 %v2027
    %v2127 = vunpack.c.l.b16 %v2028
    %v2128 = vunpack.c.h.b16 %v2028
    %v2129 = vunpack.c.l.b16 %v2029
    %v2130 = vunpack.c.h.b16 %v2029
    %v2131 = vunpack.c.l.b16 %v2030
    %v2132 = vunpack.c.h.b16 %v2030
    %v2133 = vunpack.c.l.b16 %v2031
    %v2134 = vunpack.c.h.b16 %v2031
    %v2135 = vunpack.c.l.b16 %v2032
    %v2136 = vunpack.c.h.b16 %v2032
    %v2137 = vunpack.c.l.b16 %v2033
    %v2138 = vunpack.c.h.b16 %v2033
    %v2139 = vunpack.c.l.b16 %v2034
    %v2140 = vunpack.c.h.b16 %v2034
    %v2141 = vunpack.c.l.b16 %v2035
    %v2142 = vunpack.c.h.b16 %v2035
    %v2143 = vunpack.c.l.b16 %v2036
    %v2144 = vunpack.c.h.b16 %v2036
    %v2145 = vpack.c.b16 %v2083, %v2081
    %v2146 = vpack.c.b16 %v2084, %v2082
    %v2147 = vpack.c.b16 %v2087, %v2085
    %v2148 = vpack.c.b16 %v2088, %v2086
    %v2149 = vpack.c.b16 %v2091, %v2089
    %v2150 = vpack.c.b16 %v2092, %v2090
    %v2151 = vpack.c.b16 %v2095, %v2093
    %v2152 = vpack.c.b16 %v2096, %v2094
    %v2153 = vpack.c.b16 %v2099, %v2097
    %v2154 = vpack.c.b16 %v2100, %v2098
    %v2155 = vpack.c.b16 %v2103, %v2101
    %v2156 = vpack.c.b16 %v2104, %v2102
    %v2157 = vpack.c.b16 %v2107, %v2105
    %v2158 = vpack.c.b16 %v2108, %v2106
    %v2159 = vpack.c.b16 %v2111, %v2109
    %v2160 = vpack.c.b16 %v2112, %v2110
    %v2161 = vpack.c.b16 %v2115, %v2113
    %v2162 = vpack.c.b16 %v2116, %v2114
    %v2163 = vpack.c.b16 %v2119, %v2117
    %v2164 = vpack.c.b16 %v2120, %v2118
    %v2165 = vpack.c.b16 %v2123, %v2121
    %v2166 = vpack.c.b16 %v2124, %v2122
    %v2167 = vpack.c.b16 %v2127, %v2125
    %v2168 = vpack.c.b16 %v2128, %v2126
    %v2169 = vpack.c.b16 %v2131, %v2129
    %v2170 = vpack.c.b16 %v2132, %v2130
    %v2171 = vpack.c.b16 %v2135, %v2133
    %v2172 = vpack.c.b16 %v2136, %v2134
    %v2173 = vpack.c.b16 %v2139, %v2137
    %v2174 = vpack.c.b16 %v2140, %v2138
    %v2175 = vpack.c.b16 %v2143, %v2141
    %v2176 = vpack.c.b16 %v2144, %v2142
    %2209 = vmatprep.subr.bf16.mxu0 %v2146
    %2210 = vmatpush1.bf16.msra.mxu0 %v2145
    %2211 = vmatprep.subr.bf16.mxu0 %v2148
    %2212 = vmatpush1.bf16.msra.mxu0 %v2147
    %2213 = vmatprep.subr.bf16.mxu0 %v2150
    %2214 = vmatpush1.bf16.msra.mxu0 %v2149
    %2215 = vmatprep.subr.bf16.mxu0 %v2152
    %2216 = vmatpush1.bf16.msra.mxu0 %v2151
    %2217 = vmatprep.subr.bf16.mxu0 %v2154
    %2218 = vmatpush1.bf16.msra.mxu0 %v2153
    %2219 = vmatprep.subr.bf16.mxu0 %v2156
    %2220 = vmatpush1.bf16.msra.mxu0 %v2155
    %2221 = vmatprep.subr.bf16.mxu0 %v2158
    %2222 = vmatpush1.bf16.msra.mxu0 %v2157
    %2223 = vmatprep.subr.bf16.mxu0 %v2160
    %2224 = vmatpush1.bf16.msra.mxu0 %v2159
    %2225 = vmatprep.subr.bf16.mxu0 %v2162
    %2226 = vmatpush1.bf16.msra.mxu0 %v2161
    %2227 = vmatprep.subr.bf16.mxu0 %v2164
    %2228 = vmatpush1.bf16.msra.mxu0 %v2163
    %2229 = vmatprep.subr.bf16.mxu0 %v2166
    %2230 = vmatpush1.bf16.msra.mxu0 %v2165
    %2231 = vmatprep.subr.bf16.mxu0 %v2168
    %2232 = vmatpush1.bf16.msra.mxu0 %v2167
    %2233 = vmatprep.subr.bf16.mxu0 %v2170
    %2234 = vmatpush1.bf16.msra.mxu0 %v2169
    %2235 = vmatprep.subr.bf16.mxu0 %v2172
    %2236 = vmatpush1.bf16.msra.mxu0 %v2171
    %2237 = vmatprep.subr.bf16.mxu0 %v2174
    %2238 = vmatpush1.bf16.msra.mxu0 %v2173
    %2239 = vmatprep.subr.bf16.mxu0 %v2176
    %2240 = vmatpush1.bf16.msra.mxu0 %v2175
    %2241 = vmatprep.mubr.bf16.mxu0 %v2004
    %2242 = vmatmul.mubr.bf16.gmra.mrb[0].mxu0 %v2003
    %v2243 = vpop.f32.mrb[0].mxu0
    %v2244 = vadd.f32 %v2042, %v2243
    %v2245 = vpop.f32.mrb[0].mxu0
    %v2246 = vadd.f32 %v2046, %v2245
    %v2247 = vpop.f32.mrb[0].mxu0
    %v2248 = vadd.f32 %v2042, %v2247
    %v2249 = vpop.f32.mrb[0].mxu0
    %v2250 = vadd.f32 %v2046, %v2249
    %2251 = vdwg.mxu0
    %v2252 = vmax.f32 %v2244, 0.0
    %v2253 = vmax.f32 %v2246, 0.0
    %v2254 = vmax.f32 %v2248, 0.0
    %v2255 = vmax.f32 %v2250, 0.0
    %v2256 = vpack.c.bf16 %v2254, %v2252
    %v2257 = vpack.c.bf16 %v2255, %v2253
    %v2258 = vld [vmem:[#allocation21] sm:$0xf]
    %v2259 = vld [vmem:[#allocation21 + $0x4] sm:$0xf]
    %v2260 = vld [vmem:[#allocation21 + $0x8] sm:$0xf]
    %v2261 = vld [vmem:[#allocation21 + $0xc] sm:$0xf]
    %v2262 = vld [vmem:[#allocation21 + $0x10] sm:$0xf]
    %v2263 = vld [vmem:[#allocation21 + $0x14] sm:$0xf]
    %v2264 = vld [vmem:[#allocation21 + $0x18] sm:$0xf]
    %v2265 = vld [vmem:[#allocation21 + $0x1c] sm:$0xf]
    %v2266 = vld [vmem:[#allocation21 + $0x20] sm:$0xf]
    %v2267 = vld [vmem:[#allocation21 + $0x24] sm:$0xf]
    %v2268 = vld [vmem:[#allocation21 + $0x28] sm:$0xf]
    %v2269 = vld [vmem:[#allocation21 + $0x2c] sm:$0xf]
    %v2270 = vld [vmem:[#allocation21 + $0x30] sm:$0xf]
    %v2271 = vld [vmem:[#allocation21 + $0x34] sm:$0xf]
    %v2272 = vld [vmem:[#allocation21 + $0x38] sm:$0xf]
    %v2273 = vld [vmem:[#allocation21 + $0x3c] sm:$0xf]
    %v2274 = vld [vmem:[#allocation21 + $0x40] sm:$0xf]
    %v2275 = vld [vmem:[#allocation21 + $0x44] sm:$0xf]
    %v2276 = vld [vmem:[#allocation21 + $0x48] sm:$0xf]
    %v2277 = vld [vmem:[#allocation21 + $0x4c] sm:$0xf]
    %v2278 = vld [vmem:[#allocation21 + $0x50] sm:$0xf]
    %v2279 = vld [vmem:[#allocation21 + $0x54] sm:$0xf]
    %v2280 = vld [vmem:[#allocation21 + $0x58] sm:$0xf]
    %v2281 = vld [vmem:[#allocation21 + $0x5c] sm:$0xf]
    %v2282 = vld [vmem:[#allocation21 + $0x60] sm:$0xf]
    %v2283 = vld [vmem:[#allocation21 + $0x64] sm:$0xf]
    %v2284 = vld [vmem:[#allocation21 + $0x68] sm:$0xf]
    %v2285 = vld [vmem:[#allocation21 + $0x6c] sm:$0xf]
    %v2286 = vld [vmem:[#allocation21 + $0x70] sm:$0xf]
    %v2287 = vld [vmem:[#allocation21 + $0x74] sm:$0xf]
    %v2288 = vld [vmem:[#allocation21 + $0x78] sm:$0xf]
    %v2289 = vld [vmem:[#allocation21 + $0x7c] sm:$0xf]
    %v2290 = vld [vmem:[%s10] sm:$0x1]
    %v2292 = vlaneseq
    %v2293 = vshrl.u32 %v2292, 7
    %v2294 = vsub.s32 0, %v2293
    %v2295 = vrot.slane %v2290, %v2294
    %v2329 = vunpack.c.l.b16 %v2258
    %v2330 = vunpack.c.l.b16 %v2259
    %v2331 = vunpack.c.l.b16 %v2260
    %v2332 = vunpack.c.l.b16 %v2261
    %v2333 = vunpack.c.l.b16 %v2262
    %v2334 = vunpack.c.l.b16 %v2263
    %v2335 = vunpack.c.l.b16 %v2264
    %v2336 = vunpack.c.l.b16 %v2265
    %v2337 = vunpack.c.l.b16 %v2266
    %v2338 = vunpack.c.l.b16 %v2267
    %v2339 = vunpack.c.l.b16 %v2268
    %v2340 = vunpack.c.l.b16 %v2269
    %v2341 = vunpack.c.l.b16 %v2270
    %v2342 = vunpack.c.l.b16 %v2271
    %v2343 = vunpack.c.l.b16 %v2272
    %v2344 = vunpack.c.l.b16 %v2273
    %v2345 = vunpack.c.l.b16 %v2274
    %v2346 = vunpack.c.l.b16 %v2275
    %v2347 = vunpack.c.l.b16 %v2276
    %v2348 = vunpack.c.l.b16 %v2277
    %v2349 = vunpack.c.l.b16 %v2278
    %v2350 = vunpack.c.l.b16 %v2279
    %v2351 = vunpack.c.l.b16 %v2280
    %v2352 = vunpack.c.l.b16 %v2281
    %v2353 = vunpack.c.l.b16 %v2282
    %v2354 = vunpack.c.l.b16 %v2283
    %v2355 = vunpack.c.l.b16 %v2284
    %v2356 = vunpack.c.l.b16 %v2285
    %v2357 = vunpack.c.l.b16 %v2286
    %v2358 = vunpack.c.l.b16 %v2287
    %v2359 = vunpack.c.l.b16 %v2288
    %v2360 = vunpack.c.l.b16 %v2289
    %v2361 = vpack.c.b16 %v2330, %v2329
    %v2362 = vpack.c.b16 %v2332, %v2331
    %v2363 = vpack.c.b16 %v2334, %v2333
    %v2364 = vpack.c.b16 %v2336, %v2335
    %v2365 = vpack.c.b16 %v2338, %v2337
    %v2366 = vpack.c.b16 %v2340, %v2339
    %v2367 = vpack.c.b16 %v2342, %v2341
    %v2368 = vpack.c.b16 %v2344, %v2343
    %v2369 = vpack.c.b16 %v2346, %v2345
    %v2370 = vpack.c.b16 %v2348, %v2347
    %v2371 = vpack.c.b16 %v2350, %v2349
    %v2372 = vpack.c.b16 %v2352, %v2351
    %v2373 = vpack.c.b16 %v2354, %v2353
    %v2374 = vpack.c.b16 %v2356, %v2355
    %v2375 = vpack.c.b16 %v2358, %v2357
    %v2376 = vpack.c.b16 %v2360, %v2359
    %2393 = vmatprep.subr.bf16.mxu0 0
    %2394 = vmatpush1.bf16.msra.mxu0 %v2361
    %2395 = vmatprep.subr.bf16.mxu0 0
    %2396 = vmatpush1.bf16.msra.mxu0 %v2362
    %2397 = vmatprep.subr.bf16.mxu0 0
    %2398 = vmatpush1.bf16.msra.mxu0 %v2363
    %2399 = vmatprep.subr.bf16.mxu0 0
    %2400 = vmatpush1.bf16.msra.mxu0 %v2364
    %2401 = vmatprep.subr.bf16.mxu0 0
    %2402 = vmatpush1.bf16.msra.mxu0 %v2365
    %2403 = vmatprep.subr.bf16.mxu0 0
    %2404 = vmatpush1.bf16.msra.mxu0 %v2366
    %2405 = vmatprep.subr.bf16.mxu0 0
    %2406 = vmatpush1.bf16.msra.mxu0 %v2367
    %2407 = vmatprep.subr.bf16.mxu0 0
    %2408 = vmatpush1.bf16.msra.mxu0 %v2368
    %2409 = vmatprep.subr.bf16.mxu0 0
    %2410 = vmatpush1.bf16.msra.mxu0 %v2369
    %2411 = vmatprep.subr.bf16.mxu0 0
    %2412 = vmatpush1.bf16.msra.mxu0 %v2370
    %2413 = vmatprep.subr.bf16.mxu0 0
    %2414 = vmatpush1.bf16.msra.mxu0 %v2371
    %2415 = vmatprep.subr.bf16.mxu0 0
    %2416 = vmatpush1.bf16.msra.mxu0 %v2372
    %2417 = vmatprep.subr.bf16.mxu0 0
    %2418 = vmatpush1.bf16.msra.mxu0 %v2373
    %2419 = vmatprep.subr.bf16.mxu0 0
    %2420 = vmatpush1.bf16.msra.mxu0 %v2374
    %2421 = vmatprep.subr.bf16.mxu0 0
    %2422 = vmatpush1.bf16.msra.mxu0 %v2375
    %2423 = vmatprep.subr.bf16.mxu0 0
    %2424 = vmatpush1.bf16.msra.mxu0 %v2376
    %2425 = vmatprep.mubr.bf16.mxu0 %v2257
    %2426 = vmatmul.mubr.bf16.gmra.mrb[0].mxu0 %v2256
    %v2427 = vpop.f32.mrb[0].mxu0
    %v2428 = vadd.f32 %v2295, %v2427
    %v2429 = vpop.f32.mrb[0].mxu0
    %v2430 = vpop.f32.mrb[0].mxu0
    %v2431 = vadd.f32 %v2295, %v2430
    %v2432 = vpop.f32.mrb[0].mxu0
    %2433 = vdwg.mxu0
    %2434 = vmax.xlane.f32.xlu0 %v2428
    %v2435 = vpop.xlane.xlu0 %2434
    %2436 = vmax.xlane.f32.xlu0 %v2431
    %v2437 = vpop.xlane.xlu0 %2436
    %v2438 = vsub.f32 %v2428, %v2435
    %v2439 = vsub.f32 %v2431, %v2437
    %v2440 = vmul.f32 %v2438, 1.442695
    %v2441 = vpow.pop %v2440
    %v2442 = vmul.f32 %v2439, 1.442695
    %v2443 = vpow.pop %v2442
    %2444 = vadd.xlane.f32.xlu0 %v2441
    %v2445 = vpop.xlane.xlu0 %2444
    %2446 = vadd.xlane.f32.xlu0 %v2443
    %v2447 = vpop.xlane.xlu0 %2446
    %v2448 = vrcp.pop %v2445
    %v2449 = vmul.f32 %v2441, %v2448
    %v2450 = vrcp.pop %v2447
    %v2451 = vmul.f32 %v2443, %v2450
    %2452 = vst [vmem:[#allocation23] sm:$0xff] %v2449
    %2453 = vst [vmem:[#allocation23 + $0x8] sm:$0xff] %v2451
    // Predicated region
    $region73: #{tpu_custom_call.1} parent=1 // pred_check
      _
    $region74: #{tpu_custom_call.1} parent=1 // pred_check_branch
      %2455 = sbr.rel (0) target = $region76
    $region75: #{tpu_custom_call.1} parent=1 // pred_region
      %s2457 = ssub.s32 256, 256
      %2458 = vsyncadd [#allocation14], %s2457
      %s2459 = sshll.u32 [#allocation23], 4
      %s2460 = int_to_ptr.vmem [resolvable:$true] %s2459
      %2465 = dma.vmem_to_hbm [thread:$0]  %s2460, 256, %s11, [#allocation14], 128, 128, 8
    $region76: #{tpu_custom_call.1} parent=1 // pred_fallthru
      _
    // Predicated region
    $region77: #{tpu_custom_call.1} parent=1 // pred_check
      _
    $region78: #{tpu_custom_call.1} parent=1 // pred_check_branch
      %2467 = sbr.rel (0) target = $region80
    $region79: #{tpu_custom_call.1} parent=1 // pred_region
      %2468 = dma.done [#allocation14], 256
    $region80: #{tpu_custom_call.1} parent=1 // pred_fallthru
      _
    %2469 = vsyncpa [#allocation13], 1
    %2470 = vsyncpa [#allocation16], 1
    %2471 = vsyncpa [#allocation19], 1
    %2472 = vsyncpa [#allocation22], 1
    %2473 = vsyncpa [#allocation14], 1

</llo_original>
